<compile_context>
chip_gen: v5e
topology: v5e:2x2
jax: 0.10.0
libtpu: 0.0.40
codegen_flags: <defaults>
</compile_context>

<pallas_src>
import functools

import jax
import jax.numpy as jnp
from jax import lax
from jax.experimental import pallas as pl
from jax.experimental.pallas import tpu as pltpu


def _flash_sdpa_kernel(q_ref, k_ref, v_ref, o_ref, m_sc, l_sc, acc_sc, q_sc, *,
                       scale, mm_dtype, exp_dtype):
    ki = pl.program_id(2)

    @pl.when(ki == 0)
    def _():
        m_sc[...] = jnp.full_like(m_sc, -jnp.inf)
        l_sc[...] = jnp.zeros_like(l_sc)
        acc_sc[...] = jnp.zeros_like(acc_sc)
        # Hoisted: pre-scale (1/temperature) + cast q ONCE per (b, qi) tile
        # instead of once per ki step.
        q_sc[...] = (q_ref[...].astype(jnp.float32) * scale).astype(mm_dtype)

    q = q_sc[...]                               # (tq, D)  mm_dtype, already scaled
    k = k_ref[...].astype(mm_dtype)             # (tk, D)  (no-op cast if streamed in mm_dtype)

    # Score tile on the MXU: contract over D of both operands (no K^T materialization).
    s = lax.dot_general(q, k, dimension_numbers=(((1,), (1,)), ((), ())),
                        preferred_element_type=jnp.float32)        # (tq, tk) f32

    # Online-softmax update.
    m_prev = m_sc[...]
    m_new = jnp.maximum(m_prev, jnp.max(s, axis=-1, keepdims=True))
    alpha = jnp.exp(m_prev - m_new)                                 # (tq, 1) f32
    # exp in bf16 on v6e/v7x (bf16 EUP), f32 otherwise; l accumulated in f32.
    p = jnp.exp((s - m_new).astype(exp_dtype))                      # (tq, tk)
    l_sc[...] = alpha * l_sc[...] + jnp.sum(p, axis=-1, keepdims=True,
                                            dtype=jnp.float32)
    # TODO(synk): if XLU is the saturating slot after the EUP fix, move this row
    # sum onto the MXU (fold a ones-column into V or dot with ones((tk, 1))).
    acc_sc[...] = alpha * acc_sc[...] + jnp.dot(
        p.astype(mm_dtype), v_ref[...].astype(mm_dtype),
        preferred_element_type=jnp.float32)
    m_sc[...] = m_new

    # dropout(attn) -> identity (eval mode)

    @pl.when(ki == pl.num_programs(2) - 1)
    def _():
        o_ref[...] = (acc_sc[...] *
                      pl.reciprocal(l_sc[...], approx=True)).astype(o_ref.dtype)


def _pick_tile(length, preferred):
    """Largest MXU-friendly tile in `preferred` that divides `length`, else full length."""
    for cand in preferred:
        if length >= cand and length % cand == 0:
            return cand
    return length


def _tpu_generation():
    """Best-effort TPU generation (5 / 6 / 7); 0 if unknown."""
    try:
        kind = jax.devices()[0].device_kind.lower()
    except Exception:
        return 0
    if "v7" in kind:
        return 7
    if "v6" in kind:
        return 6
    if "v5" in kind:
        return 5
    return 0


def scaled_dot_product_attention(q, k, v, temperature, *,
                                 matmul_dtype=jnp.bfloat16,
                                 tq=None, tk=None,
                                 stream_kv_in_matmul_dtype=True):
    """q: (B, Lq, D), k: (B, Lk, D), v: (B, Lk, Dv) -> (B, Lq, Dv)."""
    B, Lq, D = q.shape
    Bk, Lk, Dk = k.shape
    Bv, Lkv, Dv = v.shape
    assert B == Bk == Bv and D == Dk and Lk == Lkv

    gen = _tpu_generation()
    mm_dtype = jnp.dtype(q.dtype) if matmul_dtype is None else jnp.dtype(matmul_dtype)

    # Stream K/V from HBM in the narrower matmul dtype: halves K/V HBM bytes on
    # v5e/v6e; identical numerics to the previous in-kernel cast-to-mm_dtype.
    if stream_kv_in_matmul_dtype and mm_dtype.itemsize < jnp.dtype(k.dtype).itemsize:
        k = k.astype(mm_dtype)
        v = v.astype(mm_dtype)

    # bf16 exp only on chips with a bf16 EUP (v6e / v7x) and only on the bf16 path.
    exp_dtype = jnp.bfloat16 if (mm_dtype == jnp.bfloat16 and gen >= 6) else jnp.float32

    # Generation-aware q tiling: larger tq => fewer K/V re-streams (traffic ~ Lq/tq).
    if tq is None:
        tq_pref = ((2048, 1024, 512, 256, 128) if gen in (5, 6)
                   else (1024, 512, 256, 128))          # v7x / unknown: 64 MiB VMEM
        tq = _pick_tile(Lq, tq_pref)
    if tk is None:
        tk = _pick_tile(Lk, (512, 256, 128))
    assert Lq % tq == 0 and Lk % tk == 0

    scale = 1.0 / float(temperature)
    kernel = functools.partial(_flash_sdpa_kernel, scale=scale,
                               mm_dtype=mm_dtype, exp_dtype=exp_dtype)

    grid = (B, Lq // tq, Lk // tk)

    in_specs = [
        pl.BlockSpec((pl.Squeezed(), tq, D), lambda b, qi, ki: (b, qi, 0)),
        pl.BlockSpec((pl.Squeezed(), tk, D), lambda b, qi, ki: (b, ki, 0)),
        pl.BlockSpec((pl.Squeezed(), tk, Dv), lambda b, qi, ki: (b, ki, 0)),
        # TODO(synk): if a v5e profile shows exposed DMA wait on K/V, add
        # pipeline_mode=pl.Buffered(3) to the k/v specs (sweep depth 2 vs 3).
    ]
    out_specs = pl.BlockSpec((pl.Squeezed(), tq, Dv), lambda b, qi, ki: (b, qi, 0))

    scratch_shapes = [
        pltpu.VMEM((tq, 1), jnp.float32),    # running max m
        pltpu.VMEM((tq, 1), jnp.float32),    # running denominator l
        pltpu.VMEM((tq, Dv), jnp.float32),   # running output accumulator
        pltpu.VMEM((tq, D), mm_dtype),       # hoisted, pre-scaled q tile
    ]

    # VMEM budget: double-buffered I/O tiles + scratch + in-kernel temporaries,
    # with generation-aware caps (leave headroom for Mosaic internal scratch).
    q_item = jnp.dtype(q.dtype).itemsize
    kv_item = jnp.dtype(k.dtype).itemsize
    mm_item = mm_dtype.itemsize
    exp_item = jnp.dtype(exp_dtype).itemsize
    out_item = q_item
    io_bytes = 2 * (tq * D * q_item + tq * Dv * out_item
                    + tk * D * kv_item + tk * Dv * kv_item)
    scratch_bytes = (tq * Dv + 2 * tq) * 4 + tq * D * mm_item
    tmp_bytes = tq * tk * (4 + exp_item + mm_item) + tk * (D + Dv) * mm_item
    cap = (100 << 20) if gen in (5, 6) else (52 << 20)
    vmem_limit = int(min(max(2 * (io_bytes + scratch_bytes + tmp_bytes), 32 << 20),
                         cap))

    cost = pl.CostEstimate(
        flops=2 * B * Lq * Lk * (D + Dv),
        transcendentals=B * Lq * Lk + B * Lq * (Lk // tk) + B * Lq,
        bytes_accessed=(B * Lq * D * q_item
                        + B * (Lq // tq) * Lk * (D + Dv) * kv_item
                        + B * Lq * Dv * out_item),
    )

    # TODO(synk): on v7x, if a profile shows one TensorCore idle, switch the batch
    # (or qi) grid axis to pltpu.CORE_PARALLEL.
    return pl.pallas_call(
        kernel,
        out_shape=jax.ShapeDtypeStruct((B, Lq, Dv), q.dtype),
        grid_spec=pltpu.PrefetchScalarGridSpec(
            num_scalar_prefetch=0,
            grid=grid,
            in_specs=in_specs,
            out_specs=out_specs,
            scratch_shapes=scratch_shapes,
        ),
        compiler_params=pltpu.CompilerParams(
            dimension_semantics=("parallel", "parallel", "arbitrary"),
            vmem_limit_bytes=vmem_limit,
        ),
        cost_estimate=cost,
    )(q, k, v)


def _reference(q, k, v, temperature):
    attn = jnp.einsum('bqd,bkd->bqk', q, k) / temperature
    attn = jax.nn.softmax(attn, axis=2)
    return jnp.einsum('bqk,bkd->bqd', attn, v)


if __name__ == "__main__":
    key = jax.random.PRNGKey(0)
    kq, kk, kv = jax.random.split(key, 3)

    # Lane-dense head dim (multiple of 128) and MXU-sized sequence tiles.
    B, Lq, Lk, D = 2, 256, 256, 128
    temperature = float(D) ** 0.5   # typical: sqrt(d_k)

    q = jax.random.normal(kq, (B, Lq, D), dtype=jnp.float32)
    k = jax.random.normal(kk, (B, Lk, D), dtype=jnp.float32)
    v = jax.random.normal(kv, (B, Lk, D), dtype=jnp.float32)

    ref = _reference(q, k, v, temperature)

    # Default path: bf16 K/V streaming + bf16 MXU matmuls, f32 softmax accumulation
    # (bf16 exp on v6e/v7x only).
    out_bf16 = jax.block_until_ready(
        scaled_dot_product_attention(q, k, v, temperature))
    assert out_bf16.shape == (B, Lq, D)
    assert jnp.allclose(out_bf16, ref, atol=3e-2, rtol=3e-2), \
        "bf16-matmul kernel mismatch vs reference"

    # Full-precision path (tighter check; only approx-reciprocal differs).
    out_f32 = jax.block_until_ready(
        scaled_dot_product_attention(q, k, v, temperature, matmul_dtype=None))
    assert jnp.allclose(out_f32, ref, atol=1e-2, rtol=1e-2), \
        "f32-matmul kernel mismatch vs reference"

    print("KERNEL_OK")
</pallas_src>

<mosaic_0001>
module attributes {stable_mosaic.version = 11 : i64} {
  func.func @_flash_sdpa_kernel(%arg0: i32, %arg1: i32, %arg2: i32, %arg3: memref<1x256x128xf32, #tpu.memory_space<vmem>>, %arg4: memref<1x256x128xbf16, #tpu.memory_space<vmem>>, %arg5: memref<1x256x128xbf16, #tpu.memory_space<vmem>>, %arg6: memref<1x256x128xf32, #tpu.memory_space<vmem>>, %arg7: memref<256x1xf32, #tpu.memory_space<vmem>>, %arg8: memref<256x1xf32, #tpu.memory_space<vmem>>, %arg9: memref<256x128xf32, #tpu.memory_space<vmem>>, %arg10: memref<256x128xbf16, #tpu.memory_space<vmem>>) attributes {dimension_semantics = [#tpu.dimension_semantics<parallel>, #tpu.dimension_semantics<parallel>, #tpu.dimension_semantics<arbitrary>], iteration_bounds = array<i64: 2, 1, 1>, scalar_prefetch = 0 : i64, scratch_operands = 4 : i64, tpu.core_type = #tpu.core_type<tc>, window_params = [{transform_indices = @transform_0, window_bounds = array<i64: 1, 256, 128>}, {transform_indices = @transform_1, window_bounds = array<i64: 1, 256, 128>}, {transform_indices = @transform_2, window_bounds = array<i64: 1, 256, 128>}, {transform_indices = @transform_3, window_bounds = array<i64: 1, 256, 128>}]} {
    %c0_i32 = arith.constant 0 : i32
    %0 = arith.cmpi eq, %arg2, %c0_i32 : i32
    %1 = arith.extui %0 : i1 to i32
    %c0_i32_0 = arith.constant 0 : i32
    %2 = arith.cmpi ne, %1, %c0_i32_0 : i32
    scf.if %2 {
      %cst_25 = arith.constant 0xFF800000 : f32
      %35 = vector.broadcast %cst_25 : f32 to vector<256x1xf32>
      %c0_26 = arith.constant 0 : index
      %c0_27 = arith.constant 0 : index
      %36 = vector.load %arg7[%c0_26, %c0_27] : memref<256x1xf32, #tpu.memory_space<vmem>>, vector<256x1xf32>
      tpu.vector_store %arg7[%c0_26, %c0_27], %35 {strides = array<i32>} : memref<256x1xf32, #tpu.memory_space<vmem>>, vector<256x1xf32>,
      %cst_28 = arith.constant 0.000000e+00 : f32
      %37 = vector.broadcast %cst_28 : f32 to vector<256x1xf32>
      %c0_29 = arith.constant 0 : index
      %c0_30 = arith.constant 0 : index
      %38 = vector.load %arg8[%c0_29, %c0_30] : memref<256x1xf32, #tpu.memory_space<vmem>>, vector<256x1xf32>
      tpu.vector_store %arg8[%c0_29, %c0_30], %37 {strides = array<i32>} : memref<256x1xf32, #tpu.memory_space<vmem>>, vector<256x1xf32>,
      %cst_31 = arith.constant 0.000000e+00 : f32
      %39 = vector.broadcast %cst_31 : f32 to vector<256x128xf32>
      %c0_32 = arith.constant 0 : index
      %c0_33 = arith.constant 0 : index
      %40 = vector.load %arg9[%c0_32, %c0_33] : memref<256x128xf32, #tpu.memory_space<vmem>>, vector<256x128xf32>
      tpu.vector_store %arg9[%c0_32, %c0_33], %39 {strides = array<i32>} : memref<256x128xf32, #tpu.memory_space<vmem>>, vector<256x128xf32>,
      %c0_34 = arith.constant 0 : index
      %c0_35 = arith.constant 0 : index
      %c0_36 = arith.constant 0 : index
      %41 = vector.load %arg3[%c0_34, %c0_35, %c0_36] : memref<1x256x128xf32, #tpu.memory_space<vmem>>, vector<1x256x128xf32>
      %42 = vector.shape_cast %41 : vector<1x256x128xf32> to vector<256x128xf32>
      %cst_37 = arith.constant 0.0883883461 : f32
      %43 = vector.broadcast %cst_37 : f32 to vector<256x128xf32>
      %44 = arith.mulf %42, %43 : vector<256x128xf32>
      %45 = arith.truncf %44 : vector<256x128xf32> to vector<256x128xbf16>
      %c0_38 = arith.constant 0 : index
      %c0_39 = arith.constant 0 : index
      %46 = vector.load %arg10[%c0_38, %c0_39] : memref<256x128xbf16, #tpu.memory_space<vmem>>, vector<256x128xbf16>
      tpu.vector_store %arg10[%c0_38, %c0_39], %45 {strides = array<i32>} : memref<256x128xbf16, #tpu.memory_space<vmem>>, vector<256x128xbf16>,
    } else {
    }
    %c0 = arith.constant 0 : index
    %c0_1 = arith.constant 0 : index
    %3 = vector.load %arg10[%c0, %c0_1] : memref<256x128xbf16, #tpu.memory_space<vmem>>, vector<256x128xbf16>
    %c0_2 = arith.constant 0 : index
    %c0_3 = arith.constant 0 : index
    %c0_4 = arith.constant 0 : index
    %4 = vector.load %arg4[%c0_2, %c0_3, %c0_4] : memref<1x256x128xbf16, #tpu.memory_space<vmem>>, vector<1x256x128xbf16>
    %5 = vector.shape_cast %4 : vector<1x256x128xbf16> to vector<256x128xbf16>
    %cst = arith.constant dense<0.000000e+00> : vector<256x256xf32>
    %6 = tpu.matmul %3, %5, %cst {dimension_numbers = #tpu.dot_dimension_numbers<[1], [1], [0], [0], [0, 0, 1, 0], [], []>} : vector<256x128xbf16>, vector<256x128xbf16>, vector<256x256xf32> -> vector<256x256xf32>
    %c0_5 = arith.constant 0 : index
    %c0_6 = arith.constant 0 : index
    %7 = vector.load %arg7[%c0_5, %c0_6] : memref<256x1xf32, #tpu.memory_space<vmem>>, vector<256x1xf32>
    %cst_7 = arith.constant dense<0xFF800000> : vector<256xf32>
    %8 = vector.multi_reduction <maximumf>, %6, %cst_7 [1] : vector<256x256xf32> to vector<256xf32>
    %9 = vector.shape_cast %8 : vector<256xf32> to vector<256x1xf32>
    %10 = arith.maximumf %7, %9 : vector<256x1xf32>
    %11 = arith.subf %7, %10 : vector<256x1xf32>
    %12 = math.exp %11 : vector<256x1xf32>
    %13 = vector.broadcast %10 : vector<256x1xf32> to vector<256x256xf32>
    %14 = arith.subf %6, %13 : vector<256x256xf32>
    %15 = math.exp %14 : vector<256x256xf32>
    %c0_8 = arith.constant 0 : index
    %c0_9 = arith.constant 0 : index
    %16 = vector.load %arg8[%c0_8, %c0_9] : memref<256x1xf32, #tpu.memory_space<vmem>>, vector<256x1xf32>
    %17 = arith.mulf %12, %16 : vector<256x1xf32>
    %cst_10 = arith.constant dense<0.000000e+00> : vector<256xf32>
    %18 = vector.multi_reduction <add>, %15, %cst_10 [1] : vector<256x256xf32> to vector<256xf32>
    %19 = vector.shape_cast %18 : vector<256xf32> to vector<256x1xf32>
    %20 = arith.addf %17, %19 : vector<256x1xf32>
    %c0_11 = arith.constant 0 : index
    %c0_12 = arith.constant 0 : index
    %21 = vector.load %arg8[%c0_11, %c0_12] : memref<256x1xf32, #tpu.memory_space<vmem>>, vector<256x1xf32>
    tpu.vector_store %arg8[%c0_11, %c0_12], %20 {strides = array<i32>} : memref<256x1xf32, #tpu.memory_space<vmem>>, vector<256x1xf32>,
    %c0_13 = arith.constant 0 : index
    %c0_14 = arith.constant 0 : index
    %22 = vector.load %arg9[%c0_13, %c0_14] : memref<256x128xf32, #tpu.memory_space<vmem>>, vector<256x128xf32>
    %23 = vector.broadcast %12 : vector<256x1xf32> to vector<256x128xf32>
    %24 = arith.mulf %23, %22 : vector<256x128xf32>
    %25 = arith.truncf %15 : vector<256x256xf32> to vector<256x256xbf16>
    %c0_15 = arith.constant 0 : index
    %c0_16 = arith.constant 0 : index
    %c0_17 = arith.constant 0 : index
    %26 = vector.load %arg5[%c0_15, %c0_16, %c0_17] : memref<1x256x128xbf16, #tpu.memory_space<vmem>>, vector<1x256x128xbf16>
    %27 = vector.shape_cast %26 : vector<1x256x128xbf16> to vector<256x128xbf16>
    %cst_18 = arith.constant dense<0.000000e+00> : vector<256x128xf32>
    %28 = tpu.matmul %25, %27, %cst_18 {dimension_numbers = #tpu.dot_dimension_numbers<[1], [0], [0], [1], [0, 0, 1, 1], [], []>} : vector<256x256xbf16>, vector<256x128xbf16>, vector<256x128xf32> -> vector<256x128xf32>
    %29 = arith.addf %24, %28 : vector<256x128xf32>
    %c0_19 = arith.constant 0 : index
    %c0_20 = arith.constant 0 : index
    %30 = vector.load %arg9[%c0_19, %c0_20] : memref<256x128xf32, #tpu.memory_space<vmem>>, vector<256x128xf32>
    tpu.vector_store %arg9[%c0_19, %c0_20], %29 {strides = array<i32>} : memref<256x128xf32, #tpu.memory_space<vmem>>, vector<256x128xf32>,
    %c0_21 = arith.constant 0 : index
    %c0_22 = arith.constant 0 : index
    %31 = vector.load %arg7[%c0_21, %c0_22] : memref<256x1xf32, #tpu.memory_space<vmem>>, vector<256x1xf32>
    tpu.vector_store %arg7[%c0_21, %c0_22], %10 {strides = array<i32>} : memref<256x1xf32, #tpu.memory_space<vmem>>, vector<256x1xf32>,
    %c0_i32_23 = arith.constant 0 : i32
    %32 = arith.cmpi eq, %arg2, %c0_i32_23 : i32
    %33 = arith.extui %32 : i1 to i32
    %c0_i32_24 = arith.constant 0 : i32
    %34 = arith.cmpi ne, %33, %c0_i32_24 : i32
    scf.if %34 {
      %c0_25 = arith.constant 0 : index
      %c0_26 = arith.constant 0 : index
      %35 = vector.load %arg9[%c0_25, %c0_26] : memref<256x128xf32, #tpu.memory_space<vmem>>, vector<256x128xf32>
      %c0_27 = arith.constant 0 : index
      %c0_28 = arith.constant 0 : index
      %36 = vector.load %arg8[%c0_27, %c0_28] : memref<256x1xf32, #tpu.memory_space<vmem>>, vector<256x1xf32>
      %37 = tpu.reciprocal %36 {approx = true} : vector<256x1xf32> -> vector<256x1xf32>
      %38 = vector.broadcast %37 : vector<256x1xf32> to vector<256x128xf32>
      %39 = arith.mulf %35, %38 : vector<256x128xf32>
      %c0_29 = arith.constant 0 : index
      %c0_30 = arith.constant 0 : index
      %c0_31 = arith.constant 0 : index
      %40 = vector.load %arg6[%c0_29, %c0_30, %c0_31] : memref<1x256x128xf32, #tpu.memory_space<vmem>>, vector<1x256x128xf32>
      %41 = vector.shape_cast %40 : vector<1x256x128xf32> to vector<256x128xf32>
      %42 = vector.shape_cast %39 : vector<256x128xf32> to vector<1x256x128xf32>
      tpu.vector_store %arg6[%c0_29, %c0_30, %c0_31], %42 {strides = array<i32>} : memref<1x256x128xf32, #tpu.memory_space<vmem>>, vector<1x256x128xf32>,
    } else {
    }
    return
  }
  func.func @transform_0(%arg0: i32, %arg1: i32, %arg2: i32) -> (i32, i32, i32) {
    %c0_i32 = arith.constant 0 : i32
    %c0_i32_0 = arith.constant 0 : i32
    return %arg0, %arg1, %c0_i32 : i32, i32, i32
  }
  func.func @transform_1(%arg0: i32, %arg1: i32, %arg2: i32) -> (i32, i32, i32) {
    %c0_i32 = arith.constant 0 : i32
    %c0_i32_0 = arith.constant 0 : i32
    return %arg0, %arg2, %c0_i32 : i32, i32, i32
  }
  func.func @transform_2(%arg0: i32, %arg1: i32, %arg2: i32) -> (i32, i32, i32) {
    %c0_i32 = arith.constant 0 : i32
    %c0_i32_0 = arith.constant 0 : i32
    return %arg0, %arg2, %c0_i32 : i32, i32, i32
  }
  func.func @transform_3(%arg0: i32, %arg1: i32, %arg2: i32) -> (i32, i32, i32) {
    %c0_i32 = arith.constant 0 : i32
    %c0_i32_0 = arith.constant 0 : i32
    return %arg0, %arg1, %c0_i32 : i32, i32, i32
  }
}

</mosaic_0001>

<llo_original>
// kernel: tpu_custom_call.1
$region0: #{tpu_custom_call.1}
  #allocation0 [shape = 'u32[]', space=smem, size = 0x4, offset = 0x4, fixed_abs, tag = 'smem constant byte address 0x4 - core index']
  #allocation1 [shape = 'u32[72,128]{1,0:T(1,128)}', space=vmem, size = 0x9000, scoped, tag = 'internal scratch']
  #allocation2 [shape = 'f32[256,1]{1,0:T(8,128)}', space=vmem, size = 0x20000, scoped, tag = 'scratch operand']
  #allocation3 [shape = 'f32[256,1]{1,0:T(8,128)}', space=vmem, size = 0x20000, scoped, tag = 'scratch operand']
  #allocation4 [shape = 'f32[256,128]{1,0:T(8,128)}', space=vmem, size = 0x20000, scoped, tag = 'scratch operand']
  #allocation5 [shape = 'bf16[256,128]{1,0:T(8,128)(2,1)}', space=vmem, size = 0x10000, scoped, tag = 'scratch operand']
  %s0 = inlined_call_operand.hbm [shape: f32[2,256,128], index: 0, kind: input, shape index: {}]
  %s1 = inlined_call_operand.hbm [shape: bf16[2,256,128], index: 1, kind: input, shape index: {}]
  %s2 = inlined_call_operand.hbm [shape: bf16[2,256,128], index: 2, kind: input, shape index: {}]
  %s3 = inlined_call_operand.hbm [shape: f32[2,256,128], index: 3, kind: output, shape index: {}]
  %s4 = sld [smem:[#allocation0]]
  $region65: #{tpu_custom_call.1} parent=0
    _
  %s6 = ssub.s32 1, %s4
  %s7 = scalar_select 0, %s6, %s4
  $region1: #{tpu_custom_call.1} parent=0
    #allocation6 [shape = 'u8[262144]{0}', space=vmem, size = 0x40000, scoped, tag = 'input window, operand 0']
    #allocation7 [shape = 's32[2]{0}', space=sflag, size = 0x8, scoped, tag = 'scoped memory for tpu_custom_call.1']
    #allocation8 [shape = 's32[2]{0}', space=sflag, size = 0x8, scoped, tag = 'scoped memory for tpu_custom_call.1']
    #allocation9 [shape = 'u8[131072]{0}', space=vmem, size = 0x20000, scoped, tag = 'input window, operand 1']
    #allocation10 [shape = 's32[2]{0}', space=sflag, size = 0x8, scoped, tag = 'scoped memory for tpu_custom_call.1']
    #allocation11 [shape = 'u8[131072]{0}', space=vmem, size = 0x20000, scoped, tag = 'input window, operand 2']
    #allocation12 [shape = 'u8[262144]{0}', space=vmem, size = 0x40000, scoped, tag = 'output window, operand 0']
    %8 = vsyncpa [#allocation7], 0
    %s9 = scalar_lea.sflag [#allocation7], 1
    %10 = vsyncpa %s9, 0
    %11 = vsyncpa [#allocation10], 0
    %s12 = scalar_lea.sflag [#allocation10], 1
    %13 = vsyncpa %s12, 0
    %14 = vsyncpa [#allocation8], 0
    %s15 = scalar_lea.sflag [#allocation8], 1
    %16 = vsyncpa %s15, 0
    loop: start=0, step=1, limit=4
    $region2: #{tpu_custom_call.1} parent=1 // loop_pre_header
      _
    $region3: #{tpu_custom_call.1} parent=1 // loop_header
      %s18 = sphi 0, %s22
      %p19 = scmp.ge.s32.totalorder %s18, 4
      %s25 = sphi 0, %s44
      %s26 = sphi 0, %s40
      %s27 = sphi 0, %s36
      %s28 = sphi 0, %s25
      %s29 = sphi 0, %s26
      %s30 = sphi 0, %s27
      %s31 = sphi 0, %s28
      %s32 = sphi 0, %s29
      %s33 = sphi 0, %s30
      %s49 = sphi 0, %s51
      %s52 = sphi 0, %s49
      %s53 = sphi 0, %s52
      %s69 = sphi 0, %s53
      %s77 = sphi 0, %s79
      %s80 = sphi 0, %s77
      %s81 = sphi 0, %s80
      %s97 = sphi 0, %s81
      %s105 = sphi 0, %s107
      %s108 = sphi 0, %s105
      %s109 = sphi 0, %s108
      %s125 = sphi 0, %s109
      %s133 = sphi 0, %s135
      %s136 = sphi 0, %s133
      %s137 = sphi 0, %s136
      %s153 = sphi 0, %s137
    $region4: #{tpu_custom_call.1} parent=1 // loop_header_branch
      %21 = sbr.rel (%p19) target = $region8
    $region5: #{tpu_custom_call.1} parent=1 // loop_body
      %s23 = ssub.s32 %s18, 1
      %s24 = ssub.s32 %s18, 2
      %s34 = sadd.s32 1, %s27
      %p35 = scmp.ge.s32.totalorder %s34, 1
      %s36 = scalar_select %p35, 0, %s34
      %s37 = sadd.s32 1, %s26
      %s38 = scalar_select %p35, %s37, %s26
      %p39 = scmp.ge.s32.totalorder %s38, 1
      %s40 = scalar_select %p39, 0, %s38
      %s41 = sadd.s32 1, %s25
      %s42 = scalar_select %p39, %s41, %s25
      %p43 = scmp.ge.s32.totalorder %s42, 2
      %s44 = scalar_select %p43, 0, %s42
      %s45 = ssub.s32 %s25, %s44
      %s46 = ssub.s32 %s26, %s40
      %s47 = sor.u32 %s45, %s46
      %p48 = scmp.eq.s32.totalorder %s47, 0
      %s50 = sadd.s32 %s49, 1
      %s51 = scalar_select %p48, %s49, %s50
      %p54 = pneg %p48
      %p55 = scmp.eq.s32.totalorder %s18, 1
      %p56 = por %p54, %p55
      %p57 = scmp.ne.s32.totalorder %s49, %s52
      %p58 = scmp.eq.s32.totalorder %s18, 0
      %p59 = por %p57, %p58
      %p60 = scmp.ne.s32.totalorder %s49, %s52
      %p61 = scmp.eq.s32.totalorder %s23, 1
      %p62 = por %p60, %p61
      %p63 = scmp.ne.s32.totalorder %s52, %s53
      %p64 = scmp.eq.s32.totalorder %s23, 0
      %p65 = por %p63, %p64
      %p66 = scmp.ne.s32.totalorder %s52, %s53
      %p67 = scmp.eq.s32.totalorder %s24, 1
      %p68 = por %p66, %p67
      %p70 = scmp.ne.s32.totalorder %s53, %s69
      %p71 = scmp.eq.s32.totalorder %s24, 0
      %p72 = por %p70, %p71
      %s73 = ssub.s32 %s25, %s44
      %s74 = ssub.s32 %s27, %s36
      %s75 = sor.u32 %s73, %s74
      %p76 = scmp.eq.s32.totalorder %s75, 0
      %s78 = sadd.s32 %s77, 1
      %s79 = scalar_select %p76, %s77, %s78
      %p82 = pneg %p76
      %p83 = scmp.eq.s32.totalorder %s18, 1
      %p84 = por %p82, %p83
      %p85 = scmp.ne.s32.totalorder %s77, %s80
      %p86 = scmp.eq.s32.totalorder %s18, 0
      %p87 = por %p85, %p86
      %p88 = scmp.ne.s32.totalorder %s77, %s80
      %p89 = scmp.eq.s32.totalorder %s23, 1
      %p90 = por %p88, %p89
      %p91 = scmp.ne.s32.totalorder %s80, %s81
      %p92 = scmp.eq.s32.totalorder %s23, 0
      %p93 = por %p91, %p92
      %p94 = scmp.ne.s32.totalorder %s80, %s81
      %p95 = scmp.eq.s32.totalorder %s24, 1
      %p96 = por %p94, %p95
      %p98 = scmp.ne.s32.totalorder %s81, %s97
      %p99 = scmp.eq.s32.totalorder %s24, 0
      %p100 = por %p98, %p99
      %s101 = ssub.s32 %s25, %s44
      %s102 = ssub.s32 %s27, %s36
      %s103 = sor.u32 %s101, %s102
      %p104 = scmp.eq.s32.totalorder %s103, 0
      %s106 = sadd.s32 %s105, 1
      %s107 = scalar_select %p104, %s105, %s106
      %p110 = pneg %p104
      %p111 = scmp.eq.s32.totalorder %s18, 1
      %p112 = por %p110, %p111
      %p113 = scmp.ne.s32.totalorder %s105, %s108
      %p114 = scmp.eq.s32.totalorder %s18, 0
      %p115 = por %p113, %p114
      %p116 = scmp.ne.s32.totalorder %s105, %s108
      %p117 = scmp.eq.s32.totalorder %s23, 1
      %p118 = por %p116, %p117
      %p119 = scmp.ne.s32.totalorder %s108, %s109
      %p120 = scmp.eq.s32.totalorder %s23, 0
      %p121 = por %p119, %p120
      %p122 = scmp.ne.s32.totalorder %s108, %s109
      %p123 = scmp.eq.s32.totalorder %s24, 1
      %p124 = por %p122, %p123
      %p126 = scmp.ne.s32.totalorder %s109, %s125
      %p127 = scmp.eq.s32.totalorder %s24, 0
      %p128 = por %p126, %p127
      %s129 = ssub.s32 %s25, %s44
      %s130 = ssub.s32 %s26, %s40
      %s131 = sor.u32 %s129, %s130
      %p132 = scmp.eq.s32.totalorder %s131, 0
      %s134 = sadd.s32 %s133, 1
      %s135 = scalar_select %p132, %s133, %s134
      %p138 = pneg %p132
      %p139 = scmp.eq.s32.totalorder %s18, 1
      %p140 = por %p138, %p139
      %p141 = scmp.ne.s32.totalorder %s133, %s136
      %p142 = scmp.eq.s32.totalorder %s18, 0
      %p143 = por %p141, %p142
      %p144 = scmp.ne.s32.totalorder %s133, %s136
      %p145 = scmp.eq.s32.totalorder %s23, 1
      %p146 = por %p144, %p145
      %p147 = scmp.ne.s32.totalorder %s136, %s137
      %p148 = scmp.eq.s32.totalorder %s23, 0
      %p149 = por %p147, %p148
      %p150 = scmp.ne.s32.totalorder %s136, %s137
      %p151 = scmp.eq.s32.totalorder %s24, 1
      %p152 = por %p150, %p151
      %p154 = scmp.ne.s32.totalorder %s137, %s153
      %p155 = scmp.eq.s32.totalorder %s24, 0
      %p156 = por %p154, %p155
      %p157 = scmp.le.s32.totalorder 1, %s18
      %p158 = scmp.lt.s32.totalorder %s18, 3
      %p159 = pnand %p157, %p158
      %p160 = pneg %p159
      // Predicated region
      $region9: #{tpu_custom_call.1} parent=5 // pred_check
        _
      $region10: #{tpu_custom_call.1} parent=5 // pred_check_branch
        %162 = sbr.rel (%p159) target = $region12
      $region11: #{tpu_custom_call.1} parent=5 // pred_region
        %s163 = ssub.s32 %s18, 1
      $region12: #{tpu_custom_call.1} parent=5 // pred_fallthru
        _
      %p164 = scmp.lt.s32.totalorder %s18, 2
      // Predicated region
      $region13: #{tpu_custom_call.1} parent=5 // pred_check
        %p165 = pneg %p164
      $region14: #{tpu_custom_call.1} parent=5 // pred_check_branch
        %167 = sbr.rel (%p165) target = $region16
      $region15: #{tpu_custom_call.1} parent=5 // pred_region
        // Predicated region
        $region17: #{tpu_custom_call.1} parent=15 // pred_check
          %p168 = pneg %p59
        $region18: #{tpu_custom_call.1} parent=15 // pred_check_branch
          %170 = sbr.rel (%p168) target = $region20
        $region19: #{tpu_custom_call.1} parent=15 // pred_region
          %s171 = sand.u32 %s49, 1
          %s172 = scalar_lea.sflag [#allocation7], %s171
          %s173 = sand.u32 %s49, 1
          %s174 = smul.addr %s173, 256
          %s175 = scalar_lea.vmem [#allocation6], %s174
          %s176 = smul.u32 32, %s26
          %178 = vsyncadd %s172, 0
          %s179 = smul.addr %s25, 32
          %s180 = sadd.s32 %s176, %s179
          %s181 = smul.addr %s180, 8
          %s182 = scalar_lea.hbm %s0, %s181
          %s183 = sshll.u32 %s182, 4
          %s184 = int_to_ptr.hbm [resolvable:$true] %s183
          %s185 = sshll.u32 %s175, 4
          %s186 = int_to_ptr.vmem [resolvable:$true] %s185
          %191 = dma.hbm_to_vmem [thread:$0]  %s184, 4096, %s186, %s172, 128, 128, 8
        $region20: #{tpu_custom_call.1} parent=15 // pred_fallthru
          _
        // Predicated region
        $region21: #{tpu_custom_call.1} parent=15 // pred_check
          %p192 = pneg %p87
        $region22: #{tpu_custom_call.1} parent=15 // pred_check_branch
          %194 = sbr.rel (%p192) target = $region24
        $region23: #{tpu_custom_call.1} parent=15 // pred_region
          %s195 = sand.u32 %s18, 1
          %s196 = scalar_lea.sflag [#allocation10], %s195
          %s197 = sand.u32 %s77, 1
          %s198 = smul.addr %s197, 128
          %s199 = scalar_lea.vmem [#allocation9], %s198
          %s200 = smul.u32 32, %s27
          %202 = vsyncadd %s196, 0
          %s203 = smul.addr %s25, 32
          %s204 = sadd.s32 %s200, %s203
          %s205 = smul.addr %s204, 4
          %s206 = scalar_lea.hbm %s1, %s205
          %s207 = sshll.u32 %s206, 4
          %s208 = int_to_ptr.hbm [resolvable:$true] %s207
          %s209 = sshll.u32 %s199, 4
          %s210 = int_to_ptr.vmem [resolvable:$true] %s209
          %215 = dma.hbm_to_vmem [thread:$0]  %s208, 2048, %s210, %s196, 64, 64, 4
        $region24: #{tpu_custom_call.1} parent=15 // pred_fallthru
          _
        // Predicated region
        $region25: #{tpu_custom_call.1} parent=15 // pred_check
          %p216 = pneg %p115
        $region26: #{tpu_custom_call.1} parent=15 // pred_check_branch
          %218 = sbr.rel (%p216) target = $region28
        $region27: #{tpu_custom_call.1} parent=15 // pred_region
          %s219 = sand.u32 %s18, 1
          %s220 = scalar_lea.sflag [#allocation10], %s219
          %s221 = sand.u32 %s105, 1
          %s222 = smul.addr %s221, 128
          %s223 = scalar_lea.vmem [#allocation11], %s222
          %s224 = smul.u32 32, %s27
          %226 = vsyncadd %s220, 0
          %s227 = smul.addr %s25, 32
          %s228 = sadd.s32 %s224, %s227
          %s229 = smul.addr %s228, 4
          %s230 = scalar_lea.hbm %s2, %s229
          %s231 = sshll.u32 %s230, 4
          %s232 = int_to_ptr.hbm [resolvable:$true] %s231
          %s233 = sshll.u32 %s223, 4
          %s234 = int_to_ptr.vmem [resolvable:$true] %s233
          %239 = dma.hbm_to_vmem [thread:$0]  %s232, 2048, %s234, %s220, 64, 64, 4
        $region28: #{tpu_custom_call.1} parent=15 // pred_fallthru
          _
      $region16: #{tpu_custom_call.1} parent=5 // pred_fallthru
        _
      %p240 = scmp.le.s32.totalorder 1, %s18
      %p241 = scmp.lt.s32.totalorder %s18, 3
      %p242 = pnand %p240, %p241
      %p243 = pneg %p242
      // Predicated region
      $region29: #{tpu_custom_call.1} parent=5 // pred_check
        _
      $region30: #{tpu_custom_call.1} parent=5 // pred_check_branch
        %245 = sbr.rel (%p242) target = $region32
      $region31: #{tpu_custom_call.1} parent=5 // pred_region
        %s246 = ssub.s32 %s18, 1
        %s247 = sand.u32 %s52, 1
        %s248 = scalar_lea.sflag [#allocation7], %s247
        %s249 = sand.u32 %s52, 1
        %s250 = smul.addr %s249, 256
        %s251 = scalar_lea.vmem [#allocation6], %s250
        // Predicated region
        $region33: #{tpu_custom_call.1} parent=31 // pred_check
          %p252 = pneg %p65
        $region34: #{tpu_custom_call.1} parent=31 // pred_check_branch
          %254 = sbr.rel (%p252) target = $region36
        $region35: #{tpu_custom_call.1} parent=31 // pred_region
          %256 = dma.done %s248, 4096
        $region36: #{tpu_custom_call.1} parent=31 // pred_fallthru
          _
        %s257 = sand.u32 %s23, 1
        %s258 = scalar_lea.sflag [#allocation10], %s257
        %s259 = sand.u32 %s80, 1
        %s260 = smul.addr %s259, 128
        %s261 = scalar_lea.vmem [#allocation9], %s260
        // Predicated region
        $region37: #{tpu_custom_call.1} parent=31 // pred_check
          %p262 = pneg %p93
        $region38: #{tpu_custom_call.1} parent=31 // pred_check_branch
          %264 = sbr.rel (%p262) target = $region40
        $region39: #{tpu_custom_call.1} parent=31 // pred_region
          %266 = dma.done %s258, 2048
        $region40: #{tpu_custom_call.1} parent=31 // pred_fallthru
          _
        %s267 = sand.u32 %s23, 1
        %s268 = scalar_lea.sflag [#allocation10], %s267
        %s269 = sand.u32 %s108, 1
        %s270 = smul.addr %s269, 128
        %s271 = scalar_lea.vmem [#allocation11], %s270
        // Predicated region
        $region41: #{tpu_custom_call.1} parent=31 // pred_check
          %p272 = pneg %p121
        $region42: #{tpu_custom_call.1} parent=31 // pred_check_branch
          %274 = sbr.rel (%p272) target = $region44
        $region43: #{tpu_custom_call.1} parent=31 // pred_region
          %276 = dma.done %s268, 2048
        $region44: #{tpu_custom_call.1} parent=31 // pred_fallthru
          _
        %s277 = sand.u32 %s52, 1
        %s278 = scalar_lea.sflag [#allocation7], %s277
        %s279 = sand.u32 %s52, 1
        %s280 = smul.addr %s279, 256
        %s281 = scalar_lea.vmem [#allocation6], %s280
        %p282 = pneg %p65
        %p283 = pneg %p62
        %s284 = sand.u32 %s23, 1
        %s285 = scalar_lea.sflag [#allocation10], %s284
        %s286 = sand.u32 %s80, 1
        %s287 = smul.addr %s286, 128
        %s288 = scalar_lea.vmem [#allocation9], %s287
        %p289 = pneg %p93
        %p290 = pneg %p90
        %s291 = sand.u32 %s23, 1
        %s292 = scalar_lea.sflag [#allocation10], %s291
        %s293 = sand.u32 %s108, 1
        %s294 = smul.addr %s293, 128
        %s295 = scalar_lea.vmem [#allocation11], %s294
        %p296 = pneg %p121
        %p297 = pneg %p118
        %p298 = pneg %p149
        %p299 = pneg %p146
        %s300 = sand.u32 %s136, 1
        %s301 = scalar_lea.sflag [#allocation8], %s300
        %s302 = sand.u32 %s136, 1
        %s303 = smul.addr %s302, 256
        %s304 = scalar_lea.vmem [#allocation12], %s303
        %s305 = smul.u32 32, %s29
        %s306 = smul.u32 32, %s30
        %s307 = smul.u32 32, %s30
        %s308 = smul.u32 32, %s29
        %p309 = scmp.eq.s32.totalorder %s30, 0
        // Predicated region
        $region45: #{tpu_custom_call.1} parent=31 // pred_check
          %p310 = pneg %p309
        $region46: #{tpu_custom_call.1} parent=31 // pred_check_branch
          %312 = sbr.rel (%p310) target = $region48
        $region47: #{tpu_custom_call.1} parent=31 // pred_region
          %vm313 = vcmask 7168
          %314 = vst.msk [vmem:[#allocation2] sm:$0xff] %vm313, -inf
          %315 = vst.msk [vmem:[#allocation2 + $0x8] sm:$0xff] %vm313, -inf
          %316 = vst.msk [vmem:[#allocation2 + $0x10] sm:$0xff] %vm313, -inf
          %317 = vst.msk [vmem:[#allocation2 + $0x18] sm:$0xff] %vm313, -inf
          %318 = vst.msk [vmem:[#allocation2 + $0x20] sm:$0xff] %vm313, -inf
          %319 = vst.msk [vmem:[#allocation2 + $0x28] sm:$0xff] %vm313, -inf
          %320 = vst.msk [vmem:[#allocation2 + $0x30] sm:$0xff] %vm313, -inf
          %321 = vst.msk [vmem:[#allocation2 + $0x38] sm:$0xff] %vm313, -inf
          %322 = vst.msk [vmem:[#allocation2 + $0x40] sm:$0xff] %vm313, -inf
          %323 = vst.msk [vmem:[#allocation2 + $0x48] sm:$0xff] %vm313, -inf
          %324 = vst.msk [vmem:[#allocation2 + $0x50] sm:$0xff] %vm313, -inf
          %325 = vst.msk [vmem:[#allocation2 + $0x58] sm:$0xff] %vm313, -inf
          %326 = vst.msk [vmem:[#allocation2 + $0x60] sm:$0xff] %vm313, -inf
          %327 = vst.msk [vmem:[#allocation2 + $0x68] sm:$0xff] %vm313, -inf
          %328 = vst.msk [vmem:[#allocation2 + $0x70] sm:$0xff] %vm313, -inf
          %329 = vst.msk [vmem:[#allocation2 + $0x78] sm:$0xff] %vm313, -inf
          %330 = vst.msk [vmem:[#allocation2 + $0x80] sm:$0xff] %vm313, -inf
          %331 = vst.msk [vmem:[#allocation2 + $0x88] sm:$0xff] %vm313, -inf
          %332 = vst.msk [vmem:[#allocation2 + $0x90] sm:$0xff] %vm313, -inf
          %333 = vst.msk [vmem:[#allocation2 + $0x98] sm:$0xff] %vm313, -inf
          %334 = vst.msk [vmem:[#allocation2 + $0xa0] sm:$0xff] %vm313, -inf
          %335 = vst.msk [vmem:[#allocation2 + $0xa8] sm:$0xff] %vm313, -inf
          %336 = vst.msk [vmem:[#allocation2 + $0xb0] sm:$0xff] %vm313, -inf
          %337 = vst.msk [vmem:[#allocation2 + $0xb8] sm:$0xff] %vm313, -inf
          %338 = vst.msk [vmem:[#allocation2 + $0xc0] sm:$0xff] %vm313, -inf
          %339 = vst.msk [vmem:[#allocation2 + $0xc8] sm:$0xff] %vm313, -inf
          %340 = vst.msk [vmem:[#allocation2 + $0xd0] sm:$0xff] %vm313, -inf
          %341 = vst.msk [vmem:[#allocation2 + $0xd8] sm:$0xff] %vm313, -inf
          %342 = vst.msk [vmem:[#allocation2 + $0xe0] sm:$0xff] %vm313, -inf
          %343 = vst.msk [vmem:[#allocation2 + $0xe8] sm:$0xff] %vm313, -inf
          %344 = vst.msk [vmem:[#allocation2 + $0xf0] sm:$0xff] %vm313, -inf
          %345 = vst.msk [vmem:[#allocation2 + $0xf8] sm:$0xff] %vm313, -inf
          %346 = vst.msk [vmem:[#allocation3] sm:$0xff] %vm313, 0.0
          %347 = vst.msk [vmem:[#allocation3 + $0x8] sm:$0xff] %vm313, 0.0
          %348 = vst.msk [vmem:[#allocation3 + $0x10] sm:$0xff] %vm313, 0.0
          %349 = vst.msk [vmem:[#allocation3 + $0x18] sm:$0xff] %vm313, 0.0
          %350 = vst.msk [vmem:[#allocation3 + $0x20] sm:$0xff] %vm313, 0.0
          %351 = vst.msk [vmem:[#allocation3 + $0x28] sm:$0xff] %vm313, 0.0
          %352 = vst.msk [vmem:[#allocation3 + $0x30] sm:$0xff] %vm313, 0.0
          %353 = vst.msk [vmem:[#allocation3 + $0x38] sm:$0xff] %vm313, 0.0
          %354 = vst.msk [vmem:[#allocation3 + $0x40] sm:$0xff] %vm313, 0.0
          %355 = vst.msk [vmem:[#allocation3 + $0x48] sm:$0xff] %vm313, 0.0
          %356 = vst.msk [vmem:[#allocation3 + $0x50] sm:$0xff] %vm313, 0.0
          %357 = vst.msk [vmem:[#allocation3 + $0x58] sm:$0xff] %vm313, 0.0
          %358 = vst.msk [vmem:[#allocation3 + $0x60] sm:$0xff] %vm313, 0.0
          %359 = vst.msk [vmem:[#allocation3 + $0x68] sm:$0xff] %vm313, 0.0
          %360 = vst.msk [vmem:[#allocation3 + $0x70] sm:$0xff] %vm313, 0.0
          %361 = vst.msk [vmem:[#allocation3 + $0x78] sm:$0xff] %vm313, 0.0
          %362 = vst.msk [vmem:[#allocation3 + $0x80] sm:$0xff] %vm313, 0.0
          %363 = vst.msk [vmem:[#allocation3 + $0x88] sm:$0xff] %vm313, 0.0
          %364 = vst.msk [vmem:[#allocation3 + $0x90] sm:$0xff] %vm313, 0.0
          %365 = vst.msk [vmem:[#allocation3 + $0x98] sm:$0xff] %vm313, 0.0
          %366 = vst.msk [vmem:[#allocation3 + $0xa0] sm:$0xff] %vm313, 0.0
          %367 = vst.msk [vmem:[#allocation3 + $0xa8] sm:$0xff] %vm313, 0.0
          %368 = vst.msk [vmem:[#allocation3 + $0xb0] sm:$0xff] %vm313, 0.0
          %369 = vst.msk [vmem:[#allocation3 + $0xb8] sm:$0xff] %vm313, 0.0
          %370 = vst.msk [vmem:[#allocation3 + $0xc0] sm:$0xff] %vm313, 0.0
          %371 = vst.msk [vmem:[#allocation3 + $0xc8] sm:$0xff] %vm313, 0.0
          %372 = vst.msk [vmem:[#allocation3 + $0xd0] sm:$0xff] %vm313, 0.0
          %373 = vst.msk [vmem:[#allocation3 + $0xd8] sm:$0xff] %vm313, 0.0
          %374 = vst.msk [vmem:[#allocation3 + $0xe0] sm:$0xff] %vm313, 0.0
          %375 = vst.msk [vmem:[#allocation3 + $0xe8] sm:$0xff] %vm313, 0.0
          %376 = vst.msk [vmem:[#allocation3 + $0xf0] sm:$0xff] %vm313, 0.0
          %377 = vst.msk [vmem:[#allocation3 + $0xf8] sm:$0xff] %vm313, 0.0
          %378 = vst [vmem:[#allocation4] sm:$0xff] 0.0
          %379 = vst [vmem:[#allocation4 + $0x8] sm:$0xff] 0.0
          %380 = vst [vmem:[#allocation4 + $0x10] sm:$0xff] 0.0
          %381 = vst [vmem:[#allocation4 + $0x18] sm:$0xff] 0.0
          %382 = vst [vmem:[#allocation4 + $0x20] sm:$0xff] 0.0
          %383 = vst [vmem:[#allocation4 + $0x28] sm:$0xff] 0.0
          %384 = vst [vmem:[#allocation4 + $0x30] sm:$0xff] 0.0
          %385 = vst [vmem:[#allocation4 + $0x38] sm:$0xff] 0.0
          %386 = vst [vmem:[#allocation4 + $0x40] sm:$0xff] 0.0
          %387 = vst [vmem:[#allocation4 + $0x48] sm:$0xff] 0.0
          %388 = vst [vmem:[#allocation4 + $0x50] sm:$0xff] 0.0
          %389 = vst [vmem:[#allocation4 + $0x58] sm:$0xff] 0.0
          %390 = vst [vmem:[#allocation4 + $0x60] sm:$0xff] 0.0
          %391 = vst [vmem:[#allocation4 + $0x68] sm:$0xff] 0.0
          %392 = vst [vmem:[#allocation4 + $0x70] sm:$0xff] 0.0
          %393 = vst [vmem:[#allocation4 + $0x78] sm:$0xff] 0.0
          %394 = vst [vmem:[#allocation4 + $0x80] sm:$0xff] 0.0
          %395 = vst [vmem:[#allocation4 + $0x88] sm:$0xff] 0.0
          %396 = vst [vmem:[#allocation4 + $0x90] sm:$0xff] 0.0
          %397 = vst [vmem:[#allocation4 + $0x98] sm:$0xff] 0.0
          %398 = vst [vmem:[#allocation4 + $0xa0] sm:$0xff] 0.0
          %399 = vst [vmem:[#allocation4 + $0xa8] sm:$0xff] 0.0
          %400 = vst [vmem:[#allocation4 + $0xb0] sm:$0xff] 0.0
          %401 = vst [vmem:[#allocation4 + $0xb8] sm:$0xff] 0.0
          %402 = vst [vmem:[#allocation4 + $0xc0] sm:$0xff] 0.0
          %403 = vst [vmem:[#allocation4 + $0xc8] sm:$0xff] 0.0
          %404 = vst [vmem:[#allocation4 + $0xd0] sm:$0xff] 0.0
          %405 = vst [vmem:[#allocation4 + $0xd8] sm:$0xff] 0.0
          %406 = vst [vmem:[#allocation4 + $0xe0] sm:$0xff] 0.0
          %407 = vst [vmem:[#allocation4 + $0xe8] sm:$0xff] 0.0
          %408 = vst [vmem:[#allocation4 + $0xf0] sm:$0xff] 0.0
          %409 = vst [vmem:[#allocation4 + $0xf8] sm:$0xff] 0.0
          %v410 = vld [vmem:[%s251] sm:$0xff]
          %v411 = vld [vmem:[%s251 + $0x8] sm:$0xff]
          %v412 = vld [vmem:[%s251 + $0x10] sm:$0xff]
          %v413 = vld [vmem:[%s251 + $0x18] sm:$0xff]
          %v414 = vld [vmem:[%s251 + $0x20] sm:$0xff]
          %v415 = vld [vmem:[%s251 + $0x28] sm:$0xff]
          %v416 = vld [vmem:[%s251 + $0x30] sm:$0xff]
          %v417 = vld [vmem:[%s251 + $0x38] sm:$0xff]
          %v418 = vld [vmem:[%s251 + $0x40] sm:$0xff]
          %v419 = vld [vmem:[%s251 + $0x48] sm:$0xff]
          %v420 = vld [vmem:[%s251 + $0x50] sm:$0xff]
          %v421 = vld [vmem:[%s251 + $0x58] sm:$0xff]
          %v422 = vld [vmem:[%s251 + $0x60] sm:$0xff]
          %v423 = vld [vmem:[%s251 + $0x68] sm:$0xff]
          %v424 = vld [vmem:[%s251 + $0x70] sm:$0xff]
          %v425 = vld [vmem:[%s251 + $0x78] sm:$0xff]
          %v426 = vld [vmem:[%s251 + $0x80] sm:$0xff]
          %v427 = vld [vmem:[%s251 + $0x88] sm:$0xff]
          %v428 = vld [vmem:[%s251 + $0x90] sm:$0xff]
          %v429 = vld [vmem:[%s251 + $0x98] sm:$0xff]
          %v430 = vld [vmem:[%s251 + $0xa0] sm:$0xff]
          %v431 = vld [vmem:[%s251 + $0xa8] sm:$0xff]
          %v432 = vld [vmem:[%s251 + $0xb0] sm:$0xff]
          %v433 = vld [vmem:[%s251 + $0xb8] sm:$0xff]
          %v434 = vld [vmem:[%s251 + $0xc0] sm:$0xff]
          %v435 = vld [vmem:[%s251 + $0xc8] sm:$0xff]
          %v436 = vld [vmem:[%s251 + $0xd0] sm:$0xff]
          %v437 = vld [vmem:[%s251 + $0xd8] sm:$0xff]
          %v438 = vld [vmem:[%s251 + $0xe0] sm:$0xff]
          %v439 = vld [vmem:[%s251 + $0xe8] sm:$0xff]
          %v440 = vld [vmem:[%s251 + $0xf0] sm:$0xff]
          %v441 = vld [vmem:[%s251 + $0xf8] sm:$0xff]
          %v442 = vmul.f32 %v410, 0.088388346
          %v443 = vmul.f32 %v411, 0.088388346
          %v444 = vmul.f32 %v412, 0.088388346
          %v445 = vmul.f32 %v413, 0.088388346
          %v446 = vmul.f32 %v414, 0.088388346
          %v447 = vmul.f32 %v415, 0.088388346
          %v448 = vmul.f32 %v416, 0.088388346
          %v449 = vmul.f32 %v417, 0.088388346
          %v450 = vmul.f32 %v418, 0.088388346
          %v451 = vmul.f32 %v419, 0.088388346
          %v452 = vmul.f32 %v420, 0.088388346
          %v453 = vmul.f32 %v421, 0.088388346
          %v454 = vmul.f32 %v422, 0.088388346
          %v455 = vmul.f32 %v423, 0.088388346
          %v456 = vmul.f32 %v424, 0.088388346
          %v457 = vmul.f32 %v425, 0.088388346
          %v458 = vmul.f32 %v426, 0.088388346
          %v459 = vmul.f32 %v427, 0.088388346
          %v460 = vmul.f32 %v428, 0.088388346
          %v461 = vmul.f32 %v429, 0.088388346
          %v462 = vmul.f32 %v430, 0.088388346
          %v463 = vmul.f32 %v431, 0.088388346
          %v464 = vmul.f32 %v432, 0.088388346
          %v465 = vmul.f32 %v433, 0.088388346
          %v466 = vmul.f32 %v434, 0.088388346
          %v467 = vmul.f32 %v435, 0.088388346
          %v468 = vmul.f32 %v436, 0.088388346
          %v469 = vmul.f32 %v437, 0.088388346
          %v470 = vmul.f32 %v438, 0.088388346
          %v471 = vmul.f32 %v439, 0.088388346
          %v472 = vmul.f32 %v440, 0.088388346
          %v473 = vmul.f32 %v441, 0.088388346
          %v474 = vpack.c.bf16 %v442, %v442
          %v475 = vpack.c.bf16 %v443, %v443
          %v476 = vpack.c.bf16 %v444, %v444
          %v477 = vpack.c.bf16 %v445, %v445
          %v478 = vpack.c.bf16 %v446, %v446
          %v479 = vpack.c.bf16 %v447, %v447
          %v480 = vpack.c.bf16 %v448, %v448
          %v481 = vpack.c.bf16 %v449, %v449
          %v482 = vpack.c.bf16 %v450, %v450
          %v483 = vpack.c.bf16 %v451, %v451
          %v484 = vpack.c.bf16 %v452, %v452
          %v485 = vpack.c.bf16 %v453, %v453
          %v486 = vpack.c.bf16 %v454, %v454
          %v487 = vpack.c.bf16 %v455, %v455
          %v488 = vpack.c.bf16 %v456, %v456
          %v489 = vpack.c.bf16 %v457, %v457
          %v490 = vpack.c.bf16 %v458, %v458
          %v491 = vpack.c.bf16 %v459, %v459
          %v492 = vpack.c.bf16 %v460, %v460
          %v493 = vpack.c.bf16 %v461, %v461
          %v494 = vpack.c.bf16 %v462, %v462
          %v495 = vpack.c.bf16 %v463, %v463
          %v496 = vpack.c.bf16 %v464, %v464
          %v497 = vpack.c.bf16 %v465, %v465
          %v498 = vpack.c.bf16 %v466, %v466
          %v499 = vpack.c.bf16 %v467, %v467
          %v500 = vpack.c.bf16 %v468, %v468
          %v501 = vpack.c.bf16 %v469, %v469
          %v502 = vpack.c.bf16 %v470, %v470
          %v503 = vpack.c.bf16 %v471, %v471
          %v504 = vpack.c.bf16 %v472, %v472
          %v505 = vpack.c.bf16 %v473, %v473
          %506 = vst [vmem:[#allocation5] sm:$0xf] %v474
          %507 = vst [vmem:[#allocation5 + $0x4] sm:$0xf] %v475
          %508 = vst [vmem:[#allocation5 + $0x8] sm:$0xf] %v476
          %509 = vst [vmem:[#allocation5 + $0xc] sm:$0xf] %v477
          %510 = vst [vmem:[#allocation5 + $0x10] sm:$0xf] %v478
          %511 = vst [vmem:[#allocation5 + $0x14] sm:$0xf] %v479
          %512 = vst [vmem:[#allocation5 + $0x18] sm:$0xf] %v480
          %513 = vst [vmem:[#allocation5 + $0x1c] sm:$0xf] %v481
          %514 = vst [vmem:[#allocation5 + $0x20] sm:$0xf] %v482
          %515 = vst [vmem:[#allocation5 + $0x24] sm:$0xf] %v483
          %516 = vst [vmem:[#allocation5 + $0x28] sm:$0xf] %v484
          %517 = vst [vmem:[#allocation5 + $0x2c] sm:$0xf] %v485
          %518 = vst [vmem:[#allocation5 + $0x30] sm:$0xf] %v486
          %519 = vst [vmem:[#allocation5 + $0x34] sm:$0xf] %v487
          %520 = vst [vmem:[#allocation5 + $0x38] sm:$0xf] %v488
          %521 = vst [vmem:[#allocation5 + $0x3c] sm:$0xf] %v489
          %522 = vst [vmem:[#allocation5 + $0x40] sm:$0xf] %v490
          %523 = vst [vmem:[#allocation5 + $0x44] sm:$0xf] %v491
          %524 = vst [vmem:[#allocation5 + $0x48] sm:$0xf] %v492
          %525 = vst [vmem:[#allocation5 + $0x4c] sm:$0xf] %v493
          %526 = vst [vmem:[#allocation5 + $0x50] sm:$0xf] %v494
          %527 = vst [vmem:[#allocation5 + $0x54] sm:$0xf] %v495
          %528 = vst [vmem:[#allocation5 + $0x58] sm:$0xf] %v496
          %529 = vst [vmem:[#allocation5 + $0x5c] sm:$0xf] %v497
          %530 = vst [vmem:[#allocation5 + $0x60] sm:$0xf] %v498
          %531 = vst [vmem:[#allocation5 + $0x64] sm:$0xf] %v499
          %532 = vst [vmem:[#allocation5 + $0x68] sm:$0xf] %v500
          %533 = vst [vmem:[#allocation5 + $0x6c] sm:$0xf] %v501
          %534 = vst [vmem:[#allocation5 + $0x70] sm:$0xf] %v502
          %535 = vst [vmem:[#allocation5 + $0x74] sm:$0xf] %v503
          %536 = vst [vmem:[#allocation5 + $0x78] sm:$0xf] %v504
          %537 = vst [vmem:[#allocation5 + $0x7c] sm:$0xf] %v505
        $region48: #{tpu_custom_call.1} parent=31 // pred_fallthru
          _
        %v538 = vld [vmem:[#allocation5] sm:$0xf]
        %v539 = vld [vmem:[#allocation5 + $0x4] sm:$0xf]
        %v540 = vld [vmem:[#allocation5 + $0x8] sm:$0xf]
        %v541 = vld [vmem:[#allocation5 + $0xc] sm:$0xf]
        %v542 = vld [vmem:[#allocation5 + $0x10] sm:$0xf]
        %v543 = vld [vmem:[#allocation5 + $0x14] sm:$0xf]
        %v544 = vld [vmem:[#allocation5 + $0x18] sm:$0xf]
        %v545 = vld [vmem:[#allocation5 + $0x1c] sm:$0xf]
        %v546 = vld [vmem:[#allocation5 + $0x20] sm:$0xf]
        %v547 = vld [vmem:[#allocation5 + $0x24] sm:$0xf]
        %v548 = vld [vmem:[#allocation5 + $0x28] sm:$0xf]
        %v549 = vld [vmem:[#allocation5 + $0x2c] sm:$0xf]
        %v550 = vld [vmem:[#allocation5 + $0x30] sm:$0xf]
        %v551 = vld [vmem:[#allocation5 + $0x34] sm:$0xf]
        %v552 = vld [vmem:[#allocation5 + $0x38] sm:$0xf]
        %v553 = vld [vmem:[#allocation5 + $0x3c] sm:$0xf]
        %v554 = vld [vmem:[#allocation5 + $0x40] sm:$0xf]
        %v555 = vld [vmem:[#allocation5 + $0x44] sm:$0xf]
        %v556 = vld [vmem:[#allocation5 + $0x48] sm:$0xf]
        %v557 = vld [vmem:[#allocation5 + $0x4c] sm:$0xf]
        %v558 = vld [vmem:[#allocation5 + $0x50] sm:$0xf]
        %v559 = vld [vmem:[#allocation5 + $0x54] sm:$0xf]
        %v560 = vld [vmem:[#allocation5 + $0x58] sm:$0xf]
        %v561 = vld [vmem:[#allocation5 + $0x5c] sm:$0xf]
        %v562 = vld [vmem:[#allocation5 + $0x60] sm:$0xf]
        %v563 = vld [vmem:[#allocation5 + $0x64] sm:$0xf]
        %v564 = vld [vmem:[#allocation5 + $0x68] sm:$0xf]
        %v565 = vld [vmem:[#allocation5 + $0x6c] sm:$0xf]
        %v566 = vld [vmem:[#allocation5 + $0x70] sm:$0xf]
        %v567 = vld [vmem:[#allocation5 + $0x74] sm:$0xf]
        %v568 = vld [vmem:[#allocation5 + $0x78] sm:$0xf]
        %v569 = vld [vmem:[#allocation5 + $0x7c] sm:$0xf]
        %v570 = vld [vmem:[%s261] sm:$0xf]
        %v571 = vld [vmem:[%s261 + $0x4] sm:$0xf]
        %v572 = vld [vmem:[%s261 + $0x8] sm:$0xf]
        %v573 = vld [vmem:[%s261 + $0xc] sm:$0xf]
        %v574 = vld [vmem:[%s261 + $0x10] sm:$0xf]
        %v575 = vld [vmem:[%s261 + $0x14] sm:$0xf]
        %v576 = vld [vmem:[%s261 + $0x18] sm:$0xf]
        %v577 = vld [vmem:[%s261 + $0x1c] sm:$0xf]
        %v578 = vld [vmem:[%s261 + $0x20] sm:$0xf]
        %v579 = vld [vmem:[%s261 + $0x24] sm:$0xf]
        %v580 = vld [vmem:[%s261 + $0x28] sm:$0xf]
        %v581 = vld [vmem:[%s261 + $0x2c] sm:$0xf]
        %v582 = vld [vmem:[%s261 + $0x30] sm:$0xf]
        %v583 = vld [vmem:[%s261 + $0x34] sm:$0xf]
        %v584 = vld [vmem:[%s261 + $0x38] sm:$0xf]
        %v585 = vld [vmem:[%s261 + $0x3c] sm:$0xf]
        %v586 = vld [vmem:[%s261 + $0x40] sm:$0xf]
        %v587 = vld [vmem:[%s261 + $0x44] sm:$0xf]
        %v588 = vld [vmem:[%s261 + $0x48] sm:$0xf]
        %v589 = vld [vmem:[%s261 + $0x4c] sm:$0xf]
        %v590 = vld [vmem:[%s261 + $0x50] sm:$0xf]
        %v591 = vld [vmem:[%s261 + $0x54] sm:$0xf]
        %v592 = vld [vmem:[%s261 + $0x58] sm:$0xf]
        %v593 = vld [vmem:[%s261 + $0x5c] sm:$0xf]
        %v594 = vld [vmem:[%s261 + $0x60] sm:$0xf]
        %v595 = vld [vmem:[%s261 + $0x64] sm:$0xf]
        %v596 = vld [vmem:[%s261 + $0x68] sm:$0xf]
        %v597 = vld [vmem:[%s261 + $0x6c] sm:$0xf]
        %v598 = vld [vmem:[%s261 + $0x70] sm:$0xf]
        %v599 = vld [vmem:[%s261 + $0x74] sm:$0xf]
        %v600 = vld [vmem:[%s261 + $0x78] sm:$0xf]
        %v601 = vld [vmem:[%s261 + $0x7c] sm:$0xf]
        %v634 = vunpack.c.l.b16 %v538
        %v635 = vunpack.c.l.b16 %v539
        %v636 = vunpack.c.l.b16 %v540
        %v637 = vunpack.c.l.b16 %v541
        %v638 = vunpack.c.l.b16 %v542
        %v639 = vunpack.c.l.b16 %v543
        %v640 = vunpack.c.l.b16 %v544
        %v641 = vunpack.c.l.b16 %v545
        %v642 = vunpack.c.l.b16 %v546
        %v643 = vunpack.c.l.b16 %v547
        %v644 = vunpack.c.l.b16 %v548
        %v645 = vunpack.c.l.b16 %v549
        %v646 = vunpack.c.l.b16 %v550
        %v647 = vunpack.c.l.b16 %v551
        %v648 = vunpack.c.l.b16 %v552
        %v649 = vunpack.c.l.b16 %v553
        %v650 = vunpack.c.l.b16 %v554
        %v651 = vunpack.c.l.b16 %v555
        %v652 = vunpack.c.l.b16 %v556
        %v653 = vunpack.c.l.b16 %v557
        %v654 = vunpack.c.l.b16 %v558
        %v655 = vunpack.c.l.b16 %v559
        %v656 = vunpack.c.l.b16 %v560
        %v657 = vunpack.c.l.b16 %v561
        %v658 = vunpack.c.l.b16 %v562
        %v659 = vunpack.c.l.b16 %v563
        %v660 = vunpack.c.l.b16 %v564
        %v661 = vunpack.c.l.b16 %v565
        %v662 = vunpack.c.l.b16 %v566
        %v663 = vunpack.c.l.b16 %v567
        %v664 = vunpack.c.l.b16 %v568
        %v665 = vunpack.c.l.b16 %v569
        %v666 = vpack.c.b16 %v635, %v634
        %v667 = vpack.c.b16 %v637, %v636
        %v668 = vpack.c.b16 %v639, %v638
        %v669 = vpack.c.b16 %v641, %v640
        %v670 = vpack.c.b16 %v643, %v642
        %v671 = vpack.c.b16 %v645, %v644
        %v672 = vpack.c.b16 %v647, %v646
        %v673 = vpack.c.b16 %v649, %v648
        %v674 = vpack.c.b16 %v651, %v650
        %v675 = vpack.c.b16 %v653, %v652
        %v676 = vpack.c.b16 %v655, %v654
        %v677 = vpack.c.b16 %v657, %v656
        %v678 = vpack.c.b16 %v659, %v658
        %v679 = vpack.c.b16 %v661, %v660
        %v680 = vpack.c.b16 %v663, %v662
        %v681 = vpack.c.b16 %v665, %v664
        %v730 = vunpack.c.l.b16 %v570
        %v731 = vunpack.c.l.b16 %v571
        %v732 = vunpack.c.l.b16 %v572
        %v733 = vunpack.c.l.b16 %v573
        %v734 = vunpack.c.l.b16 %v574
        %v735 = vunpack.c.l.b16 %v575
        %v736 = vunpack.c.l.b16 %v576
        %v737 = vunpack.c.l.b16 %v577
        %v738 = vunpack.c.l.b16 %v578
        %v739 = vunpack.c.l.b16 %v579
        %v740 = vunpack.c.l.b16 %v580
        %v741 = vunpack.c.l.b16 %v581
        %v742 = vunpack.c.l.b16 %v582
        %v743 = vunpack.c.l.b16 %v583
        %v744 = vunpack.c.l.b16 %v584
        %v745 = vunpack.c.l.b16 %v585
        %v746 = vunpack.c.l.b16 %v586
        %v747 = vunpack.c.l.b16 %v587
        %v748 = vunpack.c.l.b16 %v588
        %v749 = vunpack.c.l.b16 %v589
        %v750 = vunpack.c.l.b16 %v590
        %v751 = vunpack.c.l.b16 %v591
        %v752 = vunpack.c.l.b16 %v592
        %v753 = vunpack.c.l.b16 %v593
        %v754 = vunpack.c.l.b16 %v594
        %v755 = vunpack.c.l.b16 %v595
        %v756 = vunpack.c.l.b16 %v596
        %v757 = vunpack.c.l.b16 %v597
        %v758 = vunpack.c.l.b16 %v598
        %v759 = vunpack.c.l.b16 %v599
        %v760 = vunpack.c.l.b16 %v600
        %v761 = vunpack.c.l.b16 %v601
        %v762 = vpack.c.b16 %v731, %v730
        %v763 = vpack.c.b16 %v733, %v732
        %v764 = vpack.c.b16 %v735, %v734
        %v765 = vpack.c.b16 %v737, %v736
        %v766 = vpack.c.b16 %v739, %v738
        %v767 = vpack.c.b16 %v741, %v740
        %v768 = vpack.c.b16 %v743, %v742
        %v769 = vpack.c.b16 %v745, %v744
        %v770 = vpack.c.b16 %v747, %v746
        %v771 = vpack.c.b16 %v749, %v748
        %v772 = vpack.c.b16 %v751, %v750
        %v773 = vpack.c.b16 %v753, %v752
        %v774 = vpack.c.b16 %v755, %v754
        %v775 = vpack.c.b16 %v757, %v756
        %v776 = vpack.c.b16 %v759, %v758
        %v777 = vpack.c.b16 %v761, %v760
        %794 = vmatpush.bf16.xpose.msra.mxu0 %v769
        %795 = vmatpush.bf16.xpose.msra.mxu0 %v768
        %796 = vmatpush.bf16.xpose.msra.mxu0 %v767
        %797 = vmatpush.bf16.xpose.msra.mxu0 %v766
        %798 = vmatpush.bf16.xpose.msra.mxu0 %v765
        %799 = vmatpush.bf16.xpose.msra.mxu0 %v764
        %800 = vmatpush.bf16.xpose.msra.mxu0 %v763
        %801 = vmatpush.bf16.xpose.msra.mxu0 %v762
        %802 = vmatmul.bf16.gmra.mxu0 %v666
        %v803 = vpop.f32.mrf.mxu0
        %v804 = vadd.f32 0.0, %v803
        %v805 = vpop.f32.mrf.mxu0
        %v806 = vadd.f32 0.0, %v805
        %807 = vmatmul.bf16.gmra.mxu0 %v667
        %v808 = vpop.f32.mrf.mxu0
        %v809 = vadd.f32 0.0, %v808
        %v810 = vpop.f32.mrf.mxu0
        %v811 = vadd.f32 0.0, %v810
        %812 = vmatmul.bf16.gmra.mxu0 %v668
        %v813 = vpop.f32.mrf.mxu0
        %v814 = vadd.f32 0.0, %v813
        %v815 = vpop.f32.mrf.mxu0
        %v816 = vadd.f32 0.0, %v815
        %817 = vmatmul.bf16.gmra.mxu0 %v669
        %v818 = vpop.f32.mrf.mxu0
        %v819 = vadd.f32 0.0, %v818
        %v820 = vpop.f32.mrf.mxu0
        %v821 = vadd.f32 0.0, %v820
        %822 = vmatmul.bf16.gmra.mxu0 %v670
        %v823 = vpop.f32.mrf.mxu0
        %v824 = vadd.f32 0.0, %v823
        %v825 = vpop.f32.mrf.mxu0
        %v826 = vadd.f32 0.0, %v825
        %827 = vmatmul.bf16.gmra.mxu0 %v671
        %v828 = vpop.f32.mrf.mxu0
        %v829 = vadd.f32 0.0, %v828
        %v830 = vpop.f32.mrf.mxu0
        %v831 = vadd.f32 0.0, %v830
        %832 = vmatmul.bf16.gmra.mxu0 %v672
        %v833 = vpop.f32.mrf.mxu0
        %v834 = vadd.f32 0.0, %v833
        %v835 = vpop.f32.mrf.mxu0
        %v836 = vadd.f32 0.0, %v835
        %837 = vmatmul.bf16.gmra.mxu0 %v673
        %v838 = vpop.f32.mrf.mxu0
        %v839 = vadd.f32 0.0, %v838
        %v840 = vpop.f32.mrf.mxu0
        %v841 = vadd.f32 0.0, %v840
        %842 = vmatmul.bf16.gmra.mxu0 %v674
        %v843 = vpop.f32.mrf.mxu0
        %v844 = vadd.f32 0.0, %v843
        %v845 = vpop.f32.mrf.mxu0
        %v846 = vadd.f32 0.0, %v845
        %847 = vmatmul.bf16.gmra.mxu0 %v675
        %v848 = vpop.f32.mrf.mxu0
        %v849 = vadd.f32 0.0, %v848
        %v850 = vpop.f32.mrf.mxu0
        %v851 = vadd.f32 0.0, %v850
        %852 = vmatmul.bf16.gmra.mxu0 %v676
        %v853 = vpop.f32.mrf.mxu0
        %v854 = vadd.f32 0.0, %v853
        %v855 = vpop.f32.mrf.mxu0
        %v856 = vadd.f32 0.0, %v855
        %857 = vmatmul.bf16.gmra.mxu0 %v677
        %v858 = vpop.f32.mrf.mxu0
        %v859 = vadd.f32 0.0, %v858
        %v860 = vpop.f32.mrf.mxu0
        %v861 = vadd.f32 0.0, %v860
        %862 = vmatmul.bf16.gmra.mxu0 %v678
        %v863 = vpop.f32.mrf.mxu0
        %v864 = vadd.f32 0.0, %v863
        %v865 = vpop.f32.mrf.mxu0
        %v866 = vadd.f32 0.0, %v865
        %867 = vmatmul.bf16.gmra.mxu0 %v679
        %v868 = vpop.f32.mrf.mxu0
        %v869 = vadd.f32 0.0, %v868
        %v870 = vpop.f32.mrf.mxu0
        %v871 = vadd.f32 0.0, %v870
        %872 = vmatmul.bf16.gmra.mxu0 %v680
        %v873 = vpop.f32.mrf.mxu0
        %v874 = vadd.f32 0.0, %v873
        %v875 = vpop.f32.mrf.mxu0
        %v876 = vadd.f32 0.0, %v875
        %877 = vmatmul.bf16.gmra.mxu0 %v681
        %v878 = vpop.f32.mrf.mxu0
        %v879 = vadd.f32 0.0, %v878
        %v880 = vpop.f32.mrf.mxu0
        %v881 = vadd.f32 0.0, %v880
        %882 = vdwg.mxu0
        %883 = vmatpush.bf16.xpose.msra.mxu0 %v777
        %884 = vmatpush.bf16.xpose.msra.mxu0 %v776
        %885 = vmatpush.bf16.xpose.msra.mxu0 %v775
        %886 = vmatpush.bf16.xpose.msra.mxu0 %v774
        %887 = vmatpush.bf16.xpose.msra.mxu0 %v773
        %888 = vmatpush.bf16.xpose.msra.mxu0 %v772
        %889 = vmatpush.bf16.xpose.msra.mxu0 %v771
        %890 = vmatpush.bf16.xpose.msra.mxu0 %v770
        %891 = vmatmul.bf16.gmra.mxu0 %v666
        %v892 = vpop.f32.mrf.mxu0
        %v893 = vadd.f32 0.0, %v892
        %v894 = vpop.f32.mrf.mxu0
        %v895 = vadd.f32 0.0, %v894
        %896 = vmatmul.bf16.gmra.mxu0 %v667
        %v897 = vpop.f32.mrf.mxu0
        %v898 = vadd.f32 0.0, %v897
        %v899 = vpop.f32.mrf.mxu0
        %v900 = vadd.f32 0.0, %v899
        %901 = vmatmul.bf16.gmra.mxu0 %v668
        %v902 = vpop.f32.mrf.mxu0
        %v903 = vadd.f32 0.0, %v902
        %v904 = vpop.f32.mrf.mxu0
        %v905 = vadd.f32 0.0, %v904
        %906 = vmatmul.bf16.gmra.mxu0 %v669
        %v907 = vpop.f32.mrf.mxu0
        %v908 = vadd.f32 0.0, %v907
        %v909 = vpop.f32.mrf.mxu0
        %v910 = vadd.f32 0.0, %v909
        %911 = vmatmul.bf16.gmra.mxu0 %v670
        %v912 = vpop.f32.mrf.mxu0
        %v913 = vadd.f32 0.0, %v912
        %v914 = vpop.f32.mrf.mxu0
        %v915 = vadd.f32 0.0, %v914
        %916 = vmatmul.bf16.gmra.mxu0 %v671
        %v917 = vpop.f32.mrf.mxu0
        %v918 = vadd.f32 0.0, %v917
        %v919 = vpop.f32.mrf.mxu0
        %v920 = vadd.f32 0.0, %v919
        %921 = vmatmul.bf16.gmra.mxu0 %v672
        %v922 = vpop.f32.mrf.mxu0
        %v923 = vadd.f32 0.0, %v922
        %v924 = vpop.f32.mrf.mxu0
        %v925 = vadd.f32 0.0, %v924
        %926 = vmatmul.bf16.gmra.mxu0 %v673
        %v927 = vpop.f32.mrf.mxu0
        %v928 = vadd.f32 0.0, %v927
        %v929 = vpop.f32.mrf.mxu0
        %v930 = vadd.f32 0.0, %v929
        %931 = vmatmul.bf16.gmra.mxu0 %v674
        %v932 = vpop.f32.mrf.mxu0
        %v933 = vadd.f32 0.0, %v932
        %v934 = vpop.f32.mrf.mxu0
        %v935 = vadd.f32 0.0, %v934
        %936 = vmatmul.bf16.gmra.mxu0 %v675
        %v937 = vpop.f32.mrf.mxu0
        %v938 = vadd.f32 0.0, %v937
        %v939 = vpop.f32.mrf.mxu0
        %v940 = vadd.f32 0.0, %v939
        %941 = vmatmul.bf16.gmra.mxu0 %v676
        %v942 = vpop.f32.mrf.mxu0
        %v943 = vadd.f32 0.0, %v942
        %v944 = vpop.f32.mrf.mxu0
        %v945 = vadd.f32 0.0, %v944
        %946 = vmatmul.bf16.gmra.mxu0 %v677
        %v947 = vpop.f32.mrf.mxu0
        %v948 = vadd.f32 0.0, %v947
        %v949 = vpop.f32.mrf.mxu0
        %v950 = vadd.f32 0.0, %v949
        %951 = vmatmul.bf16.gmra.mxu0 %v678
        %v952 = vpop.f32.mrf.mxu0
        %v953 = vadd.f32 0.0, %v952
        %v954 = vpop.f32.mrf.mxu0
        %v955 = vadd.f32 0.0, %v954
        %956 = vmatmul.bf16.gmra.mxu0 %v679
        %v957 = vpop.f32.mrf.mxu0
        %v958 = vadd.f32 0.0, %v957
        %v959 = vpop.f32.mrf.mxu0
        %v960 = vadd.f32 0.0, %v959
        %961 = vmatmul.bf16.gmra.mxu0 %v680
        %v962 = vpop.f32.mrf.mxu0
        %v963 = vadd.f32 0.0, %v962
        %v964 = vpop.f32.mrf.mxu0
        %v965 = vadd.f32 0.0, %v964
        %966 = vmatmul.bf16.gmra.mxu0 %v681
        %v967 = vpop.f32.mrf.mxu0
        %v968 = vadd.f32 0.0, %v967
        %v969 = vpop.f32.mrf.mxu0
        %v970 = vadd.f32 0.0, %v969
        %971 = vdwg.mxu0
        %v972 = vld [vmem:[#allocation2] sm:$0xff]
        %v973 = vld [vmem:[#allocation2 + $0x8] sm:$0xff]
        %v974 = vld [vmem:[#allocation2 + $0x10] sm:$0xff]
        %v975 = vld [vmem:[#allocation2 + $0x18] sm:$0xff]
        %v976 = vld [vmem:[#allocation2 + $0x20] sm:$0xff]
        %v977 = vld [vmem:[#allocation2 + $0x28] sm:$0xff]
        %v978 = vld [vmem:[#allocation2 + $0x30] sm:$0xff]
        %v979 = vld [vmem:[#allocation2 + $0x38] sm:$0xff]
        %v980 = vld [vmem:[#allocation2 + $0x40] sm:$0xff]
        %v981 = vld [vmem:[#allocation2 + $0x48] sm:$0xff]
        %v982 = vld [vmem:[#allocation2 + $0x50] sm:$0xff]
        %v983 = vld [vmem:[#allocation2 + $0x58] sm:$0xff]
        %v984 = vld [vmem:[#allocation2 + $0x60] sm:$0xff]
        %v985 = vld [vmem:[#allocation2 + $0x68] sm:$0xff]
        %v986 = vld [vmem:[#allocation2 + $0x70] sm:$0xff]
        %v987 = vld [vmem:[#allocation2 + $0x78] sm:$0xff]
        %v988 = vld [vmem:[#allocation2 + $0x80] sm:$0xff]
        %v989 = vld [vmem:[#allocation2 + $0x88] sm:$0xff]
        %v990 = vld [vmem:[#allocation2 + $0x90] sm:$0xff]
        %v991 = vld [vmem:[#allocation2 + $0x98] sm:$0xff]
        %v992 = vld [vmem:[#allocation2 + $0xa0] sm:$0xff]
        %v993 = vld [vmem:[#allocation2 + $0xa8] sm:$0xff]
        %v994 = vld [vmem:[#allocation2 + $0xb0] sm:$0xff]
        %v995 = vld [vmem:[#allocation2 + $0xb8] sm:$0xff]
        %v996 = vld [vmem:[#allocation2 + $0xc0] sm:$0xff]
        %v997 = vld [vmem:[#allocation2 + $0xc8] sm:$0xff]
        %v998 = vld [vmem:[#allocation2 + $0xd0] sm:$0xff]
        %v999 = vld [vmem:[#allocation2 + $0xd8] sm:$0xff]
        %v1000 = vld [vmem:[#allocation2 + $0xe0] sm:$0xff]
        %v1001 = vld [vmem:[#allocation2 + $0xe8] sm:$0xff]
        %v1002 = vld [vmem:[#allocation2 + $0xf0] sm:$0xff]
        %v1003 = vld [vmem:[#allocation2 + $0xf8] sm:$0xff]
        %v1004 = vmax.f32 %v804, %v893
        %1005 = vmax.xlane.f32.xlu0 %v1004
        %v1006 = vpop.xlane.xlu0 %1005
        %v1007 = vmax.f32 %v806, %v895
        %1008 = vmax.xlane.f32.xlu0 %v1007
        %v1009 = vpop.xlane.xlu0 %1008
        %v1010 = vmax.f32 %v809, %v898
        %1011 = vmax.xlane.f32.xlu0 %v1010
        %v1012 = vpop.xlane.xlu0 %1011
        %v1013 = vmax.f32 %v811, %v900
        %1014 = vmax.xlane.f32.xlu0 %v1013
        %v1015 = vpop.xlane.xlu0 %1014
        %v1016 = vmax.f32 %v814, %v903
        %1017 = vmax.xlane.f32.xlu0 %v1016
        %v1018 = vpop.xlane.xlu0 %1017
        %v1019 = vmax.f32 %v816, %v905
        %1020 = vmax.xlane.f32.xlu0 %v1019
        %v1021 = vpop.xlane.xlu0 %1020
        %v1022 = vmax.f32 %v819, %v908
        %1023 = vmax.xlane.f32.xlu0 %v1022
        %v1024 = vpop.xlane.xlu0 %1023
        %v1025 = vmax.f32 %v821, %v910
        %1026 = vmax.xlane.f32.xlu0 %v1025
        %v1027 = vpop.xlane.xlu0 %1026
        %v1028 = vmax.f32 %v824, %v913
        %1029 = vmax.xlane.f32.xlu0 %v1028
        %v1030 = vpop.xlane.xlu0 %1029
        %v1031 = vmax.f32 %v826, %v915
        %1032 = vmax.xlane.f32.xlu0 %v1031
        %v1033 = vpop.xlane.xlu0 %1032
        %v1034 = vmax.f32 %v829, %v918
        %1035 = vmax.xlane.f32.xlu0 %v1034
        %v1036 = vpop.xlane.xlu0 %1035
        %v1037 = vmax.f32 %v831, %v920
        %1038 = vmax.xlane.f32.xlu0 %v1037
        %v1039 = vpop.xlane.xlu0 %1038
        %v1040 = vmax.f32 %v834, %v923
        %1041 = vmax.xlane.f32.xlu0 %v1040
        %v1042 = vpop.xlane.xlu0 %1041
        %v1043 = vmax.f32 %v836, %v925
        %1044 = vmax.xlane.f32.xlu0 %v1043
        %v1045 = vpop.xlane.xlu0 %1044
        %v1046 = vmax.f32 %v839, %v928
        %1047 = vmax.xlane.f32.xlu0 %v1046
        %v1048 = vpop.xlane.xlu0 %1047
        %v1049 = vmax.f32 %v841, %v930
        %1050 = vmax.xlane.f32.xlu0 %v1049
        %v1051 = vpop.xlane.xlu0 %1050
        %v1052 = vmax.f32 %v844, %v933
        %1053 = vmax.xlane.f32.xlu0 %v1052
        %v1054 = vpop.xlane.xlu0 %1053
        %v1055 = vmax.f32 %v846, %v935
        %1056 = vmax.xlane.f32.xlu0 %v1055
        %v1057 = vpop.xlane.xlu0 %1056
        %v1058 = vmax.f32 %v849, %v938
        %1059 = vmax.xlane.f32.xlu0 %v1058
        %v1060 = vpop.xlane.xlu0 %1059
        %v1061 = vmax.f32 %v851, %v940
        %1062 = vmax.xlane.f32.xlu0 %v1061
        %v1063 = vpop.xlane.xlu0 %1062
        %v1064 = vmax.f32 %v854, %v943
        %1065 = vmax.xlane.f32.xlu0 %v1064
        %v1066 = vpop.xlane.xlu0 %1065
        %v1067 = vmax.f32 %v856, %v945
        %1068 = vmax.xlane.f32.xlu0 %v1067
        %v1069 = vpop.xlane.xlu0 %1068
        %v1070 = vmax.f32 %v859, %v948
        %1071 = vmax.xlane.f32.xlu0 %v1070
        %v1072 = vpop.xlane.xlu0 %1071
        %v1073 = vmax.f32 %v861, %v950
        %1074 = vmax.xlane.f32.xlu0 %v1073
        %v1075 = vpop.xlane.xlu0 %1074
        %v1076 = vmax.f32 %v864, %v953
        %1077 = vmax.xlane.f32.xlu0 %v1076
        %v1078 = vpop.xlane.xlu0 %1077
        %v1079 = vmax.f32 %v866, %v955
        %1080 = vmax.xlane.f32.xlu0 %v1079
        %v1081 = vpop.xlane.xlu0 %1080
        %v1082 = vmax.f32 %v869, %v958
        %1083 = vmax.xlane.f32.xlu0 %v1082
        %v1084 = vpop.xlane.xlu0 %1083
        %v1085 = vmax.f32 %v871, %v960
        %1086 = vmax.xlane.f32.xlu0 %v1085
        %v1087 = vpop.xlane.xlu0 %1086
        %v1088 = vmax.f32 %v874, %v963
        %1089 = vmax.xlane.f32.xlu0 %v1088
        %v1090 = vpop.xlane.xlu0 %1089
        %v1091 = vmax.f32 %v876, %v965
        %1092 = vmax.xlane.f32.xlu0 %v1091
        %v1093 = vpop.xlane.xlu0 %1092
        %v1094 = vmax.f32 %v879, %v968
        %1095 = vmax.xlane.f32.xlu0 %v1094
        %v1096 = vpop.xlane.xlu0 %1095
        %v1097 = vmax.f32 %v881, %v970
        %1098 = vmax.xlane.f32.xlu0 %v1097
        %v1099 = vpop.xlane.xlu0 %1098
        %v1100 = vmax.f32 %v972, %v1006
        %v1101 = vmax.f32 %v973, %v1009
        %v1102 = vmax.f32 %v974, %v1012
        %v1103 = vmax.f32 %v975, %v1015
        %v1104 = vmax.f32 %v976, %v1018
        %v1105 = vmax.f32 %v977, %v1021
        %v1106 = vmax.f32 %v978, %v1024
        %v1107 = vmax.f32 %v979, %v1027
        %v1108 = vmax.f32 %v980, %v1030
        %v1109 = vmax.f32 %v981, %v1033
        %v1110 = vmax.f32 %v982, %v1036
        %v1111 = vmax.f32 %v983, %v1039
        %v1112 = vmax.f32 %v984, %v1042
        %v1113 = vmax.f32 %v985, %v1045
        %v1114 = vmax.f32 %v986, %v1048
        %v1115 = vmax.f32 %v987, %v1051
        %v1116 = vmax.f32 %v988, %v1054
        %v1117 = vmax.f32 %v989, %v1057
        %v1118 = vmax.f32 %v990, %v1060
        %v1119 = vmax.f32 %v991, %v1063
        %v1120 = vmax.f32 %v992, %v1066
        %v1121 = vmax.f32 %v993, %v1069
        %v1122 = vmax.f32 %v994, %v1072
        %v1123 = vmax.f32 %v995, %v1075
        %v1124 = vmax.f32 %v996, %v1078
        %v1125 = vmax.f32 %v997, %v1081
        %v1126 = vmax.f32 %v998, %v1084
        %v1127 = vmax.f32 %v999, %v1087
        %v1128 = vmax.f32 %v1000, %v1090
        %v1129 = vmax.f32 %v1001, %v1093
        %v1130 = vmax.f32 %v1002, %v1096
        %v1131 = vmax.f32 %v1003, %v1099
        %v1132 = vsub.f32 %v972, %v1100
        %v1133 = vsub.f32 %v973, %v1101
        %v1134 = vsub.f32 %v974, %v1102
        %v1135 = vsub.f32 %v975, %v1103
        %v1136 = vsub.f32 %v976, %v1104
        %v1137 = vsub.f32 %v977, %v1105
        %v1138 = vsub.f32 %v978, %v1106
        %v1139 = vsub.f32 %v979, %v1107
        %v1140 = vsub.f32 %v980, %v1108
        %v1141 = vsub.f32 %v981, %v1109
        %v1142 = vsub.f32 %v982, %v1110
        %v1143 = vsub.f32 %v983, %v1111
        %v1144 = vsub.f32 %v984, %v1112
        %v1145 = vsub.f32 %v985, %v1113
        %v1146 = vsub.f32 %v986, %v1114
        %v1147 = vsub.f32 %v987, %v1115
        %v1148 = vsub.f32 %v988, %v1116
        %v1149 = vsub.f32 %v989, %v1117
        %v1150 = vsub.f32 %v990, %v1118
        %v1151 = vsub.f32 %v991, %v1119
        %v1152 = vsub.f32 %v992, %v1120
        %v1153 = vsub.f32 %v993, %v1121
        %v1154 = vsub.f32 %v994, %v1122
        %v1155 = vsub.f32 %v995, %v1123
        %v1156 = vsub.f32 %v996, %v1124
        %v1157 = vsub.f32 %v997, %v1125
        %v1158 = vsub.f32 %v998, %v1126
        %v1159 = vsub.f32 %v999, %v1127
        %v1160 = vsub.f32 %v1000, %v1128
        %v1161 = vsub.f32 %v1001, %v1129
        %v1162 = vsub.f32 %v1002, %v1130
        %v1163 = vsub.f32 %v1003, %v1131
        %v1164 = vmul.f32 %v1132, 1.442695
        %v1165 = vpow.pop %v1164
        %v1166 = vmul.f32 %v1133, 1.442695
        %v1167 = vpow.pop %v1166
        %v1168 = vmul.f32 %v1134, 1.442695
        %v1169 = vpow.pop %v1168
        %v1170 = vmul.f32 %v1135, 1.442695
        %v1171 = vpow.pop %v1170
        %v1172 = vmul.f32 %v1136, 1.442695
        %v1173 = vpow.pop %v1172
        %v1174 = vmul.f32 %v1137, 1.442695
        %v1175 = vpow.pop %v1174
        %v1176 = vmul.f32 %v1138, 1.442695
        %v1177 = vpow.pop %v1176
        %v1178 = vmul.f32 %v1139, 1.442695
        %v1179 = vpow.pop %v1178
        %v1180 = vmul.f32 %v1140, 1.442695
        %v1181 = vpow.pop %v1180
        %v1182 = vmul.f32 %v1141, 1.442695
        %v1183 = vpow.pop %v1182
        %v1184 = vmul.f32 %v1142, 1.442695
        %v1185 = vpow.pop %v1184
        %v1186 = vmul.f32 %v1143, 1.442695
        %v1187 = vpow.pop %v1186
        %v1188 = vmul.f32 %v1144, 1.442695
        %v1189 = vpow.pop %v1188
        %v1190 = vmul.f32 %v1145, 1.442695
        %v1191 = vpow.pop %v1190
        %v1192 = vmul.f32 %v1146, 1.442695
        %v1193 = vpow.pop %v1192
        %v1194 = vmul.f32 %v1147, 1.442695
        %v1195 = vpow.pop %v1194
        %v1196 = vmul.f32 %v1148, 1.442695
        %v1197 = vpow.pop %v1196
        %v1198 = vmul.f32 %v1149, 1.442695
        %v1199 = vpow.pop %v1198
        %v1200 = vmul.f32 %v1150, 1.442695
        %v1201 = vpow.pop %v1200
        %v1202 = vmul.f32 %v1151, 1.442695
        %v1203 = vpow.pop %v1202
        %v1204 = vmul.f32 %v1152, 1.442695
        %v1205 = vpow.pop %v1204
        %v1206 = vmul.f32 %v1153, 1.442695
        %v1207 = vpow.pop %v1206
        %v1208 = vmul.f32 %v1154, 1.442695
        %v1209 = vpow.pop %v1208
        %v1210 = vmul.f32 %v1155, 1.442695
        %v1211 = vpow.pop %v1210
        %v1212 = vmul.f32 %v1156, 1.442695
        %v1213 = vpow.pop %v1212
        %v1214 = vmul.f32 %v1157, 1.442695
        %v1215 = vpow.pop %v1214
        %v1216 = vmul.f32 %v1158, 1.442695
        %v1217 = vpow.pop %v1216
        %v1218 = vmul.f32 %v1159, 1.442695
        %v1219 = vpow.pop %v1218
        %v1220 = vmul.f32 %v1160, 1.442695
        %v1221 = vpow.pop %v1220
        %v1222 = vmul.f32 %v1161, 1.442695
        %v1223 = vpow.pop %v1222
        %v1224 = vmul.f32 %v1162, 1.442695
        %v1225 = vpow.pop %v1224
        %v1226 = vmul.f32 %v1163, 1.442695
        %v1227 = vpow.pop %v1226
        %1229 = vset.pattern.permute.xlu0 0
        %1230 = vperm.xlu0 %1229, %v1100
        %v1231 = vpop.permute.xlu0 %1230
        %1234 = vset.pattern.permute.xlu0 0
        %1235 = vperm.xlu0 %1234, %v1101
        %v1236 = vpop.permute.xlu0 %1235
        %1239 = vset.pattern.permute.xlu0 0
        %1240 = vperm.xlu0 %1239, %v1102
        %v1241 = vpop.permute.xlu0 %1240
        %1244 = vset.pattern.permute.xlu0 0
        %1245 = vperm.xlu0 %1244, %v1103
        %v1246 = vpop.permute.xlu0 %1245
        %1249 = vset.pattern.permute.xlu0 0
        %1250 = vperm.xlu0 %1249, %v1104
        %v1251 = vpop.permute.xlu0 %1250
        %1254 = vset.pattern.permute.xlu0 0
        %1255 = vperm.xlu0 %1254, %v1105
        %v1256 = vpop.permute.xlu0 %1255
        %1259 = vset.pattern.permute.xlu0 0
        %1260 = vperm.xlu0 %1259, %v1106
        %v1261 = vpop.permute.xlu0 %1260
        %1264 = vset.pattern.permute.xlu0 0
        %1265 = vperm.xlu0 %1264, %v1107
        %v1266 = vpop.permute.xlu0 %1265
        %1269 = vset.pattern.permute.xlu0 0
        %1270 = vperm.xlu0 %1269, %v1108
        %v1271 = vpop.permute.xlu0 %1270
        %1274 = vset.pattern.permute.xlu0 0
        %1275 = vperm.xlu0 %1274, %v1109
        %v1276 = vpop.permute.xlu0 %1275
        %1279 = vset.pattern.permute.xlu0 0
        %1280 = vperm.xlu0 %1279, %v1110
        %v1281 = vpop.permute.xlu0 %1280
        %1284 = vset.pattern.permute.xlu0 0
        %1285 = vperm.xlu0 %1284, %v1111
        %v1286 = vpop.permute.xlu0 %1285
        %1289 = vset.pattern.permute.xlu0 0
        %1290 = vperm.xlu0 %1289, %v1112
        %v1291 = vpop.permute.xlu0 %1290
        %1294 = vset.pattern.permute.xlu0 0
        %1295 = vperm.xlu0 %1294, %v1113
        %v1296 = vpop.permute.xlu0 %1295
        %1299 = vset.pattern.permute.xlu0 0
        %1300 = vperm.xlu0 %1299, %v1114
        %v1301 = vpop.permute.xlu0 %1300
        %1304 = vset.pattern.permute.xlu0 0
        %1305 = vperm.xlu0 %1304, %v1115
        %v1306 = vpop.permute.xlu0 %1305
        %1309 = vset.pattern.permute.xlu0 0
        %1310 = vperm.xlu0 %1309, %v1116
        %v1311 = vpop.permute.xlu0 %1310
        %1314 = vset.pattern.permute.xlu0 0
        %1315 = vperm.xlu0 %1314, %v1117
        %v1316 = vpop.permute.xlu0 %1315
        %1319 = vset.pattern.permute.xlu0 0
        %1320 = vperm.xlu0 %1319, %v1118
        %v1321 = vpop.permute.xlu0 %1320
        %1324 = vset.pattern.permute.xlu0 0
        %1325 = vperm.xlu0 %1324, %v1119
        %v1326 = vpop.permute.xlu0 %1325
        %1329 = vset.pattern.permute.xlu0 0
        %1330 = vperm.xlu0 %1329, %v1120
        %v1331 = vpop.permute.xlu0 %1330
        %1334 = vset.pattern.permute.xlu0 0
        %1335 = vperm.xlu0 %1334, %v1121
        %v1336 = vpop.permute.xlu0 %1335
        %1339 = vset.pattern.permute.xlu0 0
        %1340 = vperm.xlu0 %1339, %v1122
        %v1341 = vpop.permute.xlu0 %1340
        %1344 = vset.pattern.permute.xlu0 0
        %1345 = vperm.xlu0 %1344, %v1123
        %v1346 = vpop.permute.xlu0 %1345
        %1349 = vset.pattern.permute.xlu0 0
        %1350 = vperm.xlu0 %1349, %v1124
        %v1351 = vpop.permute.xlu0 %1350
        %1354 = vset.pattern.permute.xlu0 0
        %1355 = vperm.xlu0 %1354, %v1125
        %v1356 = vpop.permute.xlu0 %1355
        %1359 = vset.pattern.permute.xlu0 0
        %1360 = vperm.xlu0 %1359, %v1126
        %v1361 = vpop.permute.xlu0 %1360
        %1364 = vset.pattern.permute.xlu0 0
        %1365 = vperm.xlu0 %1364, %v1127
        %v1366 = vpop.permute.xlu0 %1365
        %1369 = vset.pattern.permute.xlu0 0
        %1370 = vperm.xlu0 %1369, %v1128
        %v1371 = vpop.permute.xlu0 %1370
        %1374 = vset.pattern.permute.xlu0 0
        %1375 = vperm.xlu0 %1374, %v1129
        %v1376 = vpop.permute.xlu0 %1375
        %1379 = vset.pattern.permute.xlu0 0
        %1380 = vperm.xlu0 %1379, %v1130
        %v1381 = vpop.permute.xlu0 %1380
        %1384 = vset.pattern.permute.xlu0 0
        %1385 = vperm.xlu0 %1384, %v1131
        %v1386 = vpop.permute.xlu0 %1385
        %v1388 = vsub.f32 %v804, %v1231
        %v1389 = vsub.f32 %v893, %v1231
        %v1390 = vsub.f32 %v806, %v1236
        %v1391 = vsub.f32 %v895, %v1236
        %v1392 = vsub.f32 %v809, %v1241
        %v1393 = vsub.f32 %v898, %v1241
        %v1394 = vsub.f32 %v811, %v1246
        %v1395 = vsub.f32 %v900, %v1246
        %v1396 = vsub.f32 %v814, %v1251
        %v1397 = vsub.f32 %v903, %v1251
        %v1398 = vsub.f32 %v816, %v1256
        %v1399 = vsub.f32 %v905, %v1256
        %v1400 = vsub.f32 %v819, %v1261
        %v1401 = vsub.f32 %v908, %v1261
        %v1402 = vsub.f32 %v821, %v1266
        %v1403 = vsub.f32 %v910, %v1266
        %v1404 = vsub.f32 %v824, %v1271
        %v1405 = vsub.f32 %v913, %v1271
        %v1406 = vsub.f32 %v826, %v1276
        %v1407 = vsub.f32 %v915, %v1276
        %v1408 = vsub.f32 %v829, %v1281
        %v1409 = vsub.f32 %v918, %v1281
        %v1410 = vsub.f32 %v831, %v1286
        %v1411 = vsub.f32 %v920, %v1286
        %v1412 = vsub.f32 %v834, %v1291
        %v1413 = vsub.f32 %v923, %v1291
        %v1414 = vsub.f32 %v836, %v1296
        %v1415 = vsub.f32 %v925, %v1296
        %v1416 = vsub.f32 %v839, %v1301
        %v1417 = vsub.f32 %v928, %v1301
        %v1418 = vsub.f32 %v841, %v1306
        %v1419 = vsub.f32 %v930, %v1306
        %v1420 = vsub.f32 %v844, %v1311
        %v1421 = vsub.f32 %v933, %v1311
        %v1422 = vsub.f32 %v846, %v1316
        %v1423 = vsub.f32 %v935, %v1316
        %v1424 = vsub.f32 %v849, %v1321
        %v1425 = vsub.f32 %v938, %v1321
        %v1426 = vsub.f32 %v851, %v1326
        %v1427 = vsub.f32 %v940, %v1326
        %v1428 = vsub.f32 %v854, %v1331
        %v1429 = vsub.f32 %v943, %v1331
        %v1430 = vsub.f32 %v856, %v1336
        %v1431 = vsub.f32 %v945, %v1336
        %v1432 = vsub.f32 %v859, %v1341
        %v1433 = vsub.f32 %v948, %v1341
        %v1434 = vsub.f32 %v861, %v1346
        %v1435 = vsub.f32 %v950, %v1346
        %v1436 = vsub.f32 %v864, %v1351
        %v1437 = vsub.f32 %v953, %v1351
        %v1438 = vsub.f32 %v866, %v1356
        %v1439 = vsub.f32 %v955, %v1356
        %v1440 = vsub.f32 %v869, %v1361
        %v1441 = vsub.f32 %v958, %v1361
        %v1442 = vsub.f32 %v871, %v1366
        %v1443 = vsub.f32 %v960, %v1366
        %v1444 = vsub.f32 %v874, %v1371
        %v1445 = vsub.f32 %v963, %v1371
        %v1446 = vsub.f32 %v876, %v1376
        %v1447 = vsub.f32 %v965, %v1376
        %v1448 = vsub.f32 %v879, %v1381
        %v1449 = vsub.f32 %v968, %v1381
        %v1450 = vsub.f32 %v881, %v1386
        %v1451 = vsub.f32 %v970, %v1386
        %v1452 = vmul.f32 %v1388, 1.442695
        %v1453 = vpow.pop %v1452
        %v1454 = vmul.f32 %v1389, 1.442695
        %v1455 = vpow.pop %v1454
        %v1456 = vmul.f32 %v1390, 1.442695
        %v1457 = vpow.pop %v1456
        %v1458 = vmul.f32 %v1391, 1.442695
        %v1459 = vpow.pop %v1458
        %v1460 = vmul.f32 %v1392, 1.442695
        %v1461 = vpow.pop %v1460
        %v1462 = vmul.f32 %v1393, 1.442695
        %v1463 = vpow.pop %v1462
        %v1464 = vmul.f32 %v1394, 1.442695
        %v1465 = vpow.pop %v1464
        %v1466 = vmul.f32 %v1395, 1.442695
        %v1467 = vpow.pop %v1466
        %v1468 = vmul.f32 %v1396, 1.442695
        %v1469 = vpow.pop %v1468
        %v1470 = vmul.f32 %v1397, 1.442695
        %v1471 = vpow.pop %v1470
        %v1472 = vmul.f32 %v1398, 1.442695
        %v1473 = vpow.pop %v1472
        %v1474 = vmul.f32 %v1399, 1.442695
        %v1475 = vpow.pop %v1474
        %v1476 = vmul.f32 %v1400, 1.442695
        %v1477 = vpow.pop %v1476
        %v1478 = vmul.f32 %v1401, 1.442695
        %v1479 = vpow.pop %v1478
        %v1480 = vmul.f32 %v1402, 1.442695
        %v1481 = vpow.pop %v1480
        %v1482 = vmul.f32 %v1403, 1.442695
        %v1483 = vpow.pop %v1482
        %v1484 = vmul.f32 %v1404, 1.442695
        %v1485 = vpow.pop %v1484
        %v1486 = vmul.f32 %v1405, 1.442695
        %v1487 = vpow.pop %v1486
        %v1488 = vmul.f32 %v1406, 1.442695
        %v1489 = vpow.pop %v1488
        %v1490 = vmul.f32 %v1407, 1.442695
        %v1491 = vpow.pop %v1490
        %v1492 = vmul.f32 %v1408, 1.442695
        %v1493 = vpow.pop %v1492
        %v1494 = vmul.f32 %v1409, 1.442695
        %v1495 = vpow.pop %v1494
        %v1496 = vmul.f32 %v1410, 1.442695
        %v1497 = vpow.pop %v1496
        %v1498 = vmul.f32 %v1411, 1.442695
        %v1499 = vpow.pop %v1498
        %v1500 = vmul.f32 %v1412, 1.442695
        %v1501 = vpow.pop %v1500
        %v1502 = vmul.f32 %v1413, 1.442695
        %v1503 = vpow.pop %v1502
        %v1504 = vmul.f32 %v1414, 1.442695
        %v1505 = vpow.pop %v1504
        %v1506 = vmul.f32 %v1415, 1.442695
        %v1507 = vpow.pop %v1506
        %v1508 = vmul.f32 %v1416, 1.442695
        %v1509 = vpow.pop %v1508
        %v1510 = vmul.f32 %v1417, 1.442695
        %v1511 = vpow.pop %v1510
        %v1512 = vmul.f32 %v1418, 1.442695
        %v1513 = vpow.pop %v1512
        %v1514 = vmul.f32 %v1419, 1.442695
        %v1515 = vpow.pop %v1514
        %v1516 = vmul.f32 %v1420, 1.442695
        %v1517 = vpow.pop %v1516
        %v1518 = vmul.f32 %v1421, 1.442695
        %v1519 = vpow.pop %v1518
        %v1520 = vmul.f32 %v1422, 1.442695
        %v1521 = vpow.pop %v1520
        %v1522 = vmul.f32 %v1423, 1.442695
        %v1523 = vpow.pop %v1522
        %v1524 = vmul.f32 %v1424, 1.442695
        %v1525 = vpow.pop %v1524
        %v1526 = vmul.f32 %v1425, 1.442695
        %v1527 = vpow.pop %v1526
        %v1528 = vmul.f32 %v1426, 1.442695
        %v1529 = vpow.pop %v1528
        %v1530 = vmul.f32 %v1427, 1.442695
        %v1531 = vpow.pop %v1530
        %v1532 = vmul.f32 %v1428, 1.442695
        %v1533 = vpow.pop %v1532
        %v1534 = vmul.f32 %v1429, 1.442695
        %v1535 = vpow.pop %v1534
        %v1536 = vmul.f32 %v1430, 1.442695
        %v1537 = vpow.pop %v1536
        %v1538 = vmul.f32 %v1431, 1.442695
        %v1539 = vpow.pop %v1538
        %v1540 = vmul.f32 %v1432, 1.442695
        %v1541 = vpow.pop %v1540
        %v1542 = vmul.f32 %v1433, 1.442695
        %v1543 = vpow.pop %v1542
        %v1544 = vmul.f32 %v1434, 1.442695
        %v1545 = vpow.pop %v1544
        %v1546 = vmul.f32 %v1435, 1.442695
        %v1547 = vpow.pop %v1546
        %v1548 = vmul.f32 %v1436, 1.442695
        %v1549 = vpow.pop %v1548
        %v1550 = vmul.f32 %v1437, 1.442695
        %v1551 = vpow.pop %v1550
        %v1552 = vmul.f32 %v1438, 1.442695
        %v1553 = vpow.pop %v1552
        %v1554 = vmul.f32 %v1439, 1.442695
        %v1555 = vpow.pop %v1554
        %v1556 = vmul.f32 %v1440, 1.442695
        %v1557 = vpow.pop %v1556
        %v1558 = vmul.f32 %v1441, 1.442695
        %v1559 = vpow.pop %v1558
        %v1560 = vmul.f32 %v1442, 1.442695
        %v1561 = vpow.pop %v1560
        %v1562 = vmul.f32 %v1443, 1.442695
        %v1563 = vpow.pop %v1562
        %v1564 = vmul.f32 %v1444, 1.442695
        %v1565 = vpow.pop %v1564
        %v1566 = vmul.f32 %v1445, 1.442695
        %v1567 = vpow.pop %v1566
        %v1568 = vmul.f32 %v1446, 1.442695
        %v1569 = vpow.pop %v1568
        %v1570 = vmul.f32 %v1447, 1.442695
        %v1571 = vpow.pop %v1570
        %v1572 = vmul.f32 %v1448, 1.442695
        %v1573 = vpow.pop %v1572
        %v1574 = vmul.f32 %v1449, 1.442695
        %v1575 = vpow.pop %v1574
        %v1576 = vmul.f32 %v1450, 1.442695
        %v1577 = vpow.pop %v1576
        %v1578 = vmul.f32 %v1451, 1.442695
        %v1579 = vpow.pop %v1578
        %v1580 = vld [vmem:[#allocation3] sm:$0xff]
        %v1581 = vld [vmem:[#allocation3 + $0x8] sm:$0xff]
        %v1582 = vld [vmem:[#allocation3 + $0x10] sm:$0xff]
        %v1583 = vld [vmem:[#allocation3 + $0x18] sm:$0xff]
        %v1584 = vld [vmem:[#allocation3 + $0x20] sm:$0xff]
        %v1585 = vld [vmem:[#allocation3 + $0x28] sm:$0xff]
        %v1586 = vld [vmem:[#allocation3 + $0x30] sm:$0xff]
        %v1587 = vld [vmem:[#allocation3 + $0x38] sm:$0xff]
        %v1588 = vld [vmem:[#allocation3 + $0x40] sm:$0xff]
        %v1589 = vld [vmem:[#allocation3 + $0x48] sm:$0xff]
        %v1590 = vld [vmem:[#allocation3 + $0x50] sm:$0xff]
        %v1591 = vld [vmem:[#allocation3 + $0x58] sm:$0xff]
        %v1592 = vld [vmem:[#allocation3 + $0x60] sm:$0xff]
        %v1593 = vld [vmem:[#allocation3 + $0x68] sm:$0xff]
        %v1594 = vld [vmem:[#allocation3 + $0x70] sm:$0xff]
        %v1595 = vld [vmem:[#allocation3 + $0x78] sm:$0xff]
        %v1596 = vld [vmem:[#allocation3 + $0x80] sm:$0xff]
        %v1597 = vld [vmem:[#allocation3 + $0x88] sm:$0xff]
        %v1598 = vld [vmem:[#allocation3 + $0x90] sm:$0xff]
        %v1599 = vld [vmem:[#allocation3 + $0x98] sm:$0xff]
        %v1600 = vld [vmem:[#allocation3 + $0xa0] sm:$0xff]
        %v1601 = vld [vmem:[#allocation3 + $0xa8] sm:$0xff]
        %v1602 = vld [vmem:[#allocation3 + $0xb0] sm:$0xff]
        %v1603 = vld [vmem:[#allocation3 + $0xb8] sm:$0xff]
        %v1604 = vld [vmem:[#allocation3 + $0xc0] sm:$0xff]
        %v1605 = vld [vmem:[#allocation3 + $0xc8] sm:$0xff]
        %v1606 = vld [vmem:[#allocation3 + $0xd0] sm:$0xff]
        %v1607 = vld [vmem:[#allocation3 + $0xd8] sm:$0xff]
        %v1608 = vld [vmem:[#allocation3 + $0xe0] sm:$0xff]
        %v1609 = vld [vmem:[#allocation3 + $0xe8] sm:$0xff]
        %v1610 = vld [vmem:[#allocation3 + $0xf0] sm:$0xff]
        %v1611 = vld [vmem:[#allocation3 + $0xf8] sm:$0xff]
        %v1612 = vmul.f32 %v1165, %v1580
        %v1613 = vmul.f32 %v1167, %v1581
        %v1614 = vmul.f32 %v1169, %v1582
        %v1615 = vmul.f32 %v1171, %v1583
        %v1616 = vmul.f32 %v1173, %v1584
        %v1617 = vmul.f32 %v1175, %v1585
        %v1618 = vmul.f32 %v1177, %v1586
        %v1619 = vmul.f32 %v1179, %v1587
        %v1620 = vmul.f32 %v1181, %v1588
        %v1621 = vmul.f32 %v1183, %v1589
        %v1622 = vmul.f32 %v1185, %v1590
        %v1623 = vmul.f32 %v1187, %v1591
        %v1624 = vmul.f32 %v1189, %v1592
        %v1625 = vmul.f32 %v1191, %v1593
        %v1626 = vmul.f32 %v1193, %v1594
        %v1627 = vmul.f32 %v1195, %v1595
        %v1628 = vmul.f32 %v1197, %v1596
        %v1629 = vmul.f32 %v1199, %v1597
        %v1630 = vmul.f32 %v1201, %v1598
        %v1631 = vmul.f32 %v1203, %v1599
        %v1632 = vmul.f32 %v1205, %v1600
        %v1633 = vmul.f32 %v1207, %v1601
        %v1634 = vmul.f32 %v1209, %v1602
        %v1635 = vmul.f32 %v1211, %v1603
        %v1636 = vmul.f32 %v1213, %v1604
        %v1637 = vmul.f32 %v1215, %v1605
        %v1638 = vmul.f32 %v1217, %v1606
        %v1639 = vmul.f32 %v1219, %v1607
        %v1640 = vmul.f32 %v1221, %v1608
        %v1641 = vmul.f32 %v1223, %v1609
        %v1642 = vmul.f32 %v1225, %v1610
        %v1643 = vmul.f32 %v1227, %v1611
        %v1644 = vadd.f32 %v1453, %v1455
        %1645 = vadd.xlane.f32.xlu0 %v1644
        %v1646 = vpop.xlane.xlu0 %1645
        %v1647 = vadd.f32 %v1457, %v1459
        %1648 = vadd.xlane.f32.xlu0 %v1647
        %v1649 = vpop.xlane.xlu0 %1648
        %v1650 = vadd.f32 %v1461, %v1463
        %1651 = vadd.xlane.f32.xlu0 %v1650
        %v1652 = vpop.xlane.xlu0 %1651
        %v1653 = vadd.f32 %v1465, %v1467
        %1654 = vadd.xlane.f32.xlu0 %v1653
        %v1655 = vpop.xlane.xlu0 %1654
        %v1656 = vadd.f32 %v1469, %v1471
        %1657 = vadd.xlane.f32.xlu0 %v1656
        %v1658 = vpop.xlane.xlu0 %1657
        %v1659 = vadd.f32 %v1473, %v1475
        %1660 = vadd.xlane.f32.xlu0 %v1659
        %v1661 = vpop.xlane.xlu0 %1660
        %v1662 = vadd.f32 %v1477, %v1479
        %1663 = vadd.xlane.f32.xlu0 %v1662
        %v1664 = vpop.xlane.xlu0 %1663
        %v1665 = vadd.f32 %v1481, %v1483
        %1666 = vadd.xlane.f32.xlu0 %v1665
        %v1667 = vpop.xlane.xlu0 %1666
        %v1668 = vadd.f32 %v1485, %v1487
        %1669 = vadd.xlane.f32.xlu0 %v1668
        %v1670 = vpop.xlane.xlu0 %1669
        %v1671 = vadd.f32 %v1489, %v1491
        %1672 = vadd.xlane.f32.xlu0 %v1671
        %v1673 = vpop.xlane.xlu0 %1672
        %v1674 = vadd.f32 %v1493, %v1495
        %1675 = vadd.xlane.f32.xlu0 %v1674
        %v1676 = vpop.xlane.xlu0 %1675
        %v1677 = vadd.f32 %v1497, %v1499
        %1678 = vadd.xlane.f32.xlu0 %v1677
        %v1679 = vpop.xlane.xlu0 %1678
        %v1680 = vadd.f32 %v1501, %v1503
        %1681 = vadd.xlane.f32.xlu0 %v1680
        %v1682 = vpop.xlane.xlu0 %1681
        %v1683 = vadd.f32 %v1505, %v1507
        %1684 = vadd.xlane.f32.xlu0 %v1683
        %v1685 = vpop.xlane.xlu0 %1684
        %v1686 = vadd.f32 %v1509, %v1511
        %1687 = vadd.xlane.f32.xlu0 %v1686
        %v1688 = vpop.xlane.xlu0 %1687
        %v1689 = vadd.f32 %v1513, %v1515
        %1690 = vadd.xlane.f32.xlu0 %v1689
        %v1691 = vpop.xlane.xlu0 %1690
        %v1692 = vadd.f32 %v1517, %v1519
        %1693 = vadd.xlane.f32.xlu0 %v1692
        %v1694 = vpop.xlane.xlu0 %1693
        %v1695 = vadd.f32 %v1521, %v1523
        %1696 = vadd.xlane.f32.xlu0 %v1695
        %v1697 = vpop.xlane.xlu0 %1696
        %v1698 = vadd.f32 %v1525, %v1527
        %1699 = vadd.xlane.f32.xlu0 %v1698
        %v1700 = vpop.xlane.xlu0 %1699
        %v1701 = vadd.f32 %v1529, %v1531
        %1702 = vadd.xlane.f32.xlu0 %v1701
        %v1703 = vpop.xlane.xlu0 %1702
        %v1704 = vadd.f32 %v1533, %v1535
        %1705 = vadd.xlane.f32.xlu0 %v1704
        %v1706 = vpop.xlane.xlu0 %1705
        %v1707 = vadd.f32 %v1537, %v1539
        %1708 = vadd.xlane.f32.xlu0 %v1707
        %v1709 = vpop.xlane.xlu0 %1708
        %v1710 = vadd.f32 %v1541, %v1543
        %1711 = vadd.xlane.f32.xlu0 %v1710
        %v1712 = vpop.xlane.xlu0 %1711
        %v1713 = vadd.f32 %v1545, %v1547
        %1714 = vadd.xlane.f32.xlu0 %v1713
        %v1715 = vpop.xlane.xlu0 %1714
        %v1716 = vadd.f32 %v1549, %v1551
        %1717 = vadd.xlane.f32.xlu0 %v1716
        %v1718 = vpop.xlane.xlu0 %1717
        %v1719 = vadd.f32 %v1553, %v1555
        %1720 = vadd.xlane.f32.xlu0 %v1719
        %v1721 = vpop.xlane.xlu0 %1720
        %v1722 = vadd.f32 %v1557, %v1559
        %1723 = vadd.xlane.f32.xlu0 %v1722
        %v1724 = vpop.xlane.xlu0 %1723
        %v1725 = vadd.f32 %v1561, %v1563
        %1726 = vadd.xlane.f32.xlu0 %v1725
        %v1727 = vpop.xlane.xlu0 %1726
        %v1728 = vadd.f32 %v1565, %v1567
        %1729 = vadd.xlane.f32.xlu0 %v1728
        %v1730 = vpop.xlane.xlu0 %1729
        %v1731 = vadd.f32 %v1569, %v1571
        %1732 = vadd.xlane.f32.xlu0 %v1731
        %v1733 = vpop.xlane.xlu0 %1732
        %v1734 = vadd.f32 %v1573, %v1575
        %1735 = vadd.xlane.f32.xlu0 %v1734
        %v1736 = vpop.xlane.xlu0 %1735
        %v1737 = vadd.f32 %v1577, %v1579
        %1738 = vadd.xlane.f32.xlu0 %v1737
        %v1739 = vpop.xlane.xlu0 %1738
        %v1740 = vadd.f32 %v1612, %v1646
        %v1741 = vadd.f32 %v1613, %v1649
        %v1742 = vadd.f32 %v1614, %v1652
        %v1743 = vadd.f32 %v1615, %v1655
        %v1744 = vadd.f32 %v1616, %v1658
        %v1745 = vadd.f32 %v1617, %v1661
        %v1746 = vadd.f32 %v1618, %v1664
        %v1747 = vadd.f32 %v1619, %v1667
        %v1748 = vadd.f32 %v1620, %v1670
        %v1749 = vadd.f32 %v1621, %v1673
        %v1750 = vadd.f32 %v1622, %v1676
        %v1751 = vadd.f32 %v1623, %v1679
        %v1752 = vadd.f32 %v1624, %v1682
        %v1753 = vadd.f32 %v1625, %v1685
        %v1754 = vadd.f32 %v1626, %v1688
        %v1755 = vadd.f32 %v1627, %v1691
        %v1756 = vadd.f32 %v1628, %v1694
        %v1757 = vadd.f32 %v1629, %v1697
        %v1758 = vadd.f32 %v1630, %v1700
        %v1759 = vadd.f32 %v1631, %v1703
        %v1760 = vadd.f32 %v1632, %v1706
        %v1761 = vadd.f32 %v1633, %v1709
        %v1762 = vadd.f32 %v1634, %v1712
        %v1763 = vadd.f32 %v1635, %v1715
        %v1764 = vadd.f32 %v1636, %v1718
        %v1765 = vadd.f32 %v1637, %v1721
        %v1766 = vadd.f32 %v1638, %v1724
        %v1767 = vadd.f32 %v1639, %v1727
        %v1768 = vadd.f32 %v1640, %v1730
        %v1769 = vadd.f32 %v1641, %v1733
        %v1770 = vadd.f32 %v1642, %v1736
        %v1771 = vadd.f32 %v1643, %v1739
        %vm1772 = vcmask 7168
        %1773 = vst.msk [vmem:[#allocation3] sm:$0xff] %vm1772, %v1740
        %1774 = vst.msk [vmem:[#allocation3 + $0x8] sm:$0xff] %vm1772, %v1741
        %1775 = vst.msk [vmem:[#allocation3 + $0x10] sm:$0xff] %vm1772, %v1742
        %1776 = vst.msk [vmem:[#allocation3 + $0x18] sm:$0xff] %vm1772, %v1743
        %1777 = vst.msk [vmem:[#allocation3 + $0x20] sm:$0xff] %vm1772, %v1744
        %1778 = vst.msk [vmem:[#allocation3 + $0x28] sm:$0xff] %vm1772, %v1745
        %1779 = vst.msk [vmem:[#allocation3 + $0x30] sm:$0xff] %vm1772, %v1746
        %1780 = vst.msk [vmem:[#allocation3 + $0x38] sm:$0xff] %vm1772, %v1747
        %1781 = vst.msk [vmem:[#allocation3 + $0x40] sm:$0xff] %vm1772, %v1748
        %1782 = vst.msk [vmem:[#allocation3 + $0x48] sm:$0xff] %vm1772, %v1749
        %1783 = vst.msk [vmem:[#allocation3 + $0x50] sm:$0xff] %vm1772, %v1750
        %1784 = vst.msk [vmem:[#allocation3 + $0x58] sm:$0xff] %vm1772, %v1751
        %1785 = vst.msk [vmem:[#allocation3 + $0x60] sm:$0xff] %vm1772, %v1752
        %1786 = vst.msk [vmem:[#allocation3 + $0x68] sm:$0xff] %vm1772, %v1753
        %1787 = vst.msk [vmem:[#allocation3 + $0x70] sm:$0xff] %vm1772, %v1754
        %1788 = vst.msk [vmem:[#allocation3 + $0x78] sm:$0xff] %vm1772, %v1755
        %1789 = vst.msk [vmem:[#allocation3 + $0x80] sm:$0xff] %vm1772, %v1756
        %1790 = vst.msk [vmem:[#allocation3 + $0x88] sm:$0xff] %vm1772, %v1757
        %1791 = vst.msk [vmem:[#allocation3 + $0x90] sm:$0xff] %vm1772, %v1758
        %1792 = vst.msk [vmem:[#allocation3 + $0x98] sm:$0xff] %vm1772, %v1759
        %1793 = vst.msk [vmem:[#allocation3 + $0xa0] sm:$0xff] %vm1772, %v1760
        %1794 = vst.msk [vmem:[#allocation3 + $0xa8] sm:$0xff] %vm1772, %v1761
        %1795 = vst.msk [vmem:[#allocation3 + $0xb0] sm:$0xff] %vm1772, %v1762
        %1796 = vst.msk [vmem:[#allocation3 + $0xb8] sm:$0xff] %vm1772, %v1763
        %1797 = vst.msk [vmem:[#allocation3 + $0xc0] sm:$0xff] %vm1772, %v1764
        %1798 = vst.msk [vmem:[#allocation3 + $0xc8] sm:$0xff] %vm1772, %v1765
        %1799 = vst.msk [vmem:[#allocation3 + $0xd0] sm:$0xff] %vm1772, %v1766
        %1800 = vst.msk [vmem:[#allocation3 + $0xd8] sm:$0xff] %vm1772, %v1767
        %1801 = vst.msk [vmem:[#allocation3 + $0xe0] sm:$0xff] %vm1772, %v1768
        %1802 = vst.msk [vmem:[#allocation3 + $0xe8] sm:$0xff] %vm1772, %v1769
        %1803 = vst.msk [vmem:[#allocation3 + $0xf0] sm:$0xff] %vm1772, %v1770
        %1804 = vst.msk [vmem:[#allocation3 + $0xf8] sm:$0xff] %vm1772, %v1771
        %v1805 = vld [vmem:[#allocation4] sm:$0xff]
        %v1806 = vld [vmem:[#allocation4 + $0x8] sm:$0xff]
        %v1807 = vld [vmem:[#allocation4 + $0x10] sm:$0xff]
        %v1808 = vld [vmem:[#allocation4 + $0x18] sm:$0xff]
        %v1809 = vld [vmem:[#allocation4 + $0x20] sm:$0xff]
        %v1810 = vld [vmem:[#allocation4 + $0x28] sm:$0xff]
        %v1811 = vld [vmem:[#allocation4 + $0x30] sm:$0xff]
        %v1812 = vld [vmem:[#allocation4 + $0x38] sm:$0xff]
        %v1813 = vld [vmem:[#allocation4 + $0x40] sm:$0xff]
        %v1814 = vld [vmem:[#allocation4 + $0x48] sm:$0xff]
        %v1815 = vld [vmem:[#allocation4 + $0x50] sm:$0xff]
        %v1816 = vld [vmem:[#allocation4 + $0x58] sm:$0xff]
        %v1817 = vld [vmem:[#allocation4 + $0x60] sm:$0xff]
        %v1818 = vld [vmem:[#allocation4 + $0x68] sm:$0xff]
        %v1819 = vld [vmem:[#allocation4 + $0x70] sm:$0xff]
        %v1820 = vld [vmem:[#allocation4 + $0x78] sm:$0xff]
        %v1821 = vld [vmem:[#allocation4 + $0x80] sm:$0xff]
        %v1822 = vld [vmem:[#allocation4 + $0x88] sm:$0xff]
        %v1823 = vld [vmem:[#allocation4 + $0x90] sm:$0xff]
        %v1824 = vld [vmem:[#allocation4 + $0x98] sm:$0xff]
        %v1825 = vld [vmem:[#allocation4 + $0xa0] sm:$0xff]
        %v1826 = vld [vmem:[#allocation4 + $0xa8] sm:$0xff]
        %v1827 = vld [vmem:[#allocation4 + $0xb0] sm:$0xff]
        %v1828 = vld [vmem:[#allocation4 + $0xb8] sm:$0xff]
        %v1829 = vld [vmem:[#allocation4 + $0xc0] sm:$0xff]
        %v1830 = vld [vmem:[#allocation4 + $0xc8] sm:$0xff]
        %v1831 = vld [vmem:[#allocation4 + $0xd0] sm:$0xff]
        %v1832 = vld [vmem:[#allocation4 + $0xd8] sm:$0xff]
        %v1833 = vld [vmem:[#allocation4 + $0xe0] sm:$0xff]
        %v1834 = vld [vmem:[#allocation4 + $0xe8] sm:$0xff]
        %v1835 = vld [vmem:[#allocation4 + $0xf0] sm:$0xff]
        %v1836 = vld [vmem:[#allocation4 + $0xf8] sm:$0xff]
        %1838 = vset.pattern.permute.xlu0 0
        %1839 = vperm.xlu0 %1838, %v1165
        %v1840 = vpop.permute.xlu0 %1839
        %1843 = vset.pattern.permute.xlu0 0
        %1844 = vperm.xlu0 %1843, %v1167
        %v1845 = vpop.permute.xlu0 %1844
        %1848 = vset.pattern.permute.xlu0 0
        %1849 = vperm.xlu0 %1848, %v1169
        %v1850 = vpop.permute.xlu0 %1849
        %1853 = vset.pattern.permute.xlu0 0
        %1854 = vperm.xlu0 %1853, %v1171
        %v1855 = vpop.permute.xlu0 %1854
        %1858 = vset.pattern.permute.xlu0 0
        %1859 = vperm.xlu0 %1858, %v1173
        %v1860 = vpop.permute.xlu0 %1859
        %1863 = vset.pattern.permute.xlu0 0
        %1864 = vperm.xlu0 %1863, %v1175
        %v1865 = vpop.permute.xlu0 %1864
        %1868 = vset.pattern.permute.xlu0 0
        %1869 = vperm.xlu0 %1868, %v1177
        %v1870 = vpop.permute.xlu0 %1869
        %1873 = vset.pattern.permute.xlu0 0
        %1874 = vperm.xlu0 %1873, %v1179
        %v1875 = vpop.permute.xlu0 %1874
        %1878 = vset.pattern.permute.xlu0 0
        %1879 = vperm.xlu0 %1878, %v1181
        %v1880 = vpop.permute.xlu0 %1879
        %1883 = vset.pattern.permute.xlu0 0
        %1884 = vperm.xlu0 %1883, %v1183
        %v1885 = vpop.permute.xlu0 %1884
        %1888 = vset.pattern.permute.xlu0 0
        %1889 = vperm.xlu0 %1888, %v1185
        %v1890 = vpop.permute.xlu0 %1889
        %1893 = vset.pattern.permute.xlu0 0
        %1894 = vperm.xlu0 %1893, %v1187
        %v1895 = vpop.permute.xlu0 %1894
        %1898 = vset.pattern.permute.xlu0 0
        %1899 = vperm.xlu0 %1898, %v1189
        %v1900 = vpop.permute.xlu0 %1899
        %1903 = vset.pattern.permute.xlu0 0
        %1904 = vperm.xlu0 %1903, %v1191
        %v1905 = vpop.permute.xlu0 %1904
        %1908 = vset.pattern.permute.xlu0 0
        %1909 = vperm.xlu0 %1908, %v1193
        %v1910 = vpop.permute.xlu0 %1909
        %1913 = vset.pattern.permute.xlu0 0
        %1914 = vperm.xlu0 %1913, %v1195
        %v1915 = vpop.permute.xlu0 %1914
        %1918 = vset.pattern.permute.xlu0 0
        %1919 = vperm.xlu0 %1918, %v1197
        %v1920 = vpop.permute.xlu0 %1919
        %1923 = vset.pattern.permute.xlu0 0
        %1924 = vperm.xlu0 %1923, %v1199
        %v1925 = vpop.permute.xlu0 %1924
        %1928 = vset.pattern.permute.xlu0 0
        %1929 = vperm.xlu0 %1928, %v1201
        %v1930 = vpop.permute.xlu0 %1929
        %1933 = vset.pattern.permute.xlu0 0
        %1934 = vperm.xlu0 %1933, %v1203
        %v1935 = vpop.permute.xlu0 %1934
        %1938 = vset.pattern.permute.xlu0 0
        %1939 = vperm.xlu0 %1938, %v1205
        %v1940 = vpop.permute.xlu0 %1939
        %1943 = vset.pattern.permute.xlu0 0
        %1944 = vperm.xlu0 %1943, %v1207
        %v1945 = vpop.permute.xlu0 %1944
        %1948 = vset.pattern.permute.xlu0 0
        %1949 = vperm.xlu0 %1948, %v1209
        %v1950 = vpop.permute.xlu0 %1949
        %1953 = vset.pattern.permute.xlu0 0
        %1954 = vperm.xlu0 %1953, %v1211
        %v1955 = vpop.permute.xlu0 %1954
        %1958 = vset.pattern.permute.xlu0 0
        %1959 = vperm.xlu0 %1958, %v1213
        %v1960 = vpop.permute.xlu0 %1959
        %1963 = vset.pattern.permute.xlu0 0
        %1964 = vperm.xlu0 %1963, %v1215
        %v1965 = vpop.permute.xlu0 %1964
        %1968 = vset.pattern.permute.xlu0 0
        %1969 = vperm.xlu0 %1968, %v1217
        %v1970 = vpop.permute.xlu0 %1969
        %1973 = vset.pattern.permute.xlu0 0
        %1974 = vperm.xlu0 %1973, %v1219
        %v1975 = vpop.permute.xlu0 %1974
        %1978 = vset.pattern.permute.xlu0 0
        %1979 = vperm.xlu0 %1978, %v1221
        %v1980 = vpop.permute.xlu0 %1979
        %1983 = vset.pattern.permute.xlu0 0
        %1984 = vperm.xlu0 %1983, %v1223
        %v1985 = vpop.permute.xlu0 %1984
        %1988 = vset.pattern.permute.xlu0 0
        %1989 = vperm.xlu0 %1988, %v1225
        %v1990 = vpop.permute.xlu0 %1989
        %1993 = vset.pattern.permute.xlu0 0
        %1994 = vperm.xlu0 %1993, %v1227
        %v1995 = vpop.permute.xlu0 %1994
        %v1997 = vmul.f32 %v1840, %v1805
        %v1998 = vmul.f32 %v1845, %v1806
        %v1999 = vmul.f32 %v1850, %v1807
        %v2000 = vmul.f32 %v1855, %v1808
        %v2001 = vmul.f32 %v1860, %v1809
        %v2002 = vmul.f32 %v1865, %v1810
        %v2003 = vmul.f32 %v1870, %v1811
        %v2004 = vmul.f32 %v1875, %v1812
        %v2005 = vmul.f32 %v1880, %v1813
        %v2006 = vmul.f32 %v1885, %v1814
        %v2007 = vmul.f32 %v1890, %v1815
        %v2008 = vmul.f32 %v1895, %v1816
        %v2009 = vmul.f32 %v1900, %v1817
        %v2010 = vmul.f32 %v1905, %v1818
        %v2011 = vmul.f32 %v1910, %v1819
        %v2012 = vmul.f32 %v1915, %v1820
        %v2013 = vmul.f32 %v1920, %v1821
        %v2014 = vmul.f32 %v1925, %v1822
        %v2015 = vmul.f32 %v1930, %v1823
        %v2016 = vmul.f32 %v1935, %v1824
        %v2017 = vmul.f32 %v1940, %v1825
        %v2018 = vmul.f32 %v1945, %v1826
        %v2019 = vmul.f32 %v1950, %v1827
        %v2020 = vmul.f32 %v1955, %v1828
        %v2021 = vmul.f32 %v1960, %v1829
        %v2022 = vmul.f32 %v1965, %v1830
        %v2023 = vmul.f32 %v1970, %v1831
        %v2024 = vmul.f32 %v1975, %v1832
        %v2025 = vmul.f32 %v1980, %v1833
        %v2026 = vmul.f32 %v1985, %v1834
        %v2027 = vmul.f32 %v1990, %v1835
        %v2028 = vmul.f32 %v1995, %v1836
        %v2029 = vpack.c.bf16 %v1457, %v1453
        %v2030 = vpack.c.bf16 %v1459, %v1455
        %v2031 = vpack.c.bf16 %v1465, %v1461
        %v2032 = vpack.c.bf16 %v1467, %v1463
        %v2033 = vpack.c.bf16 %v1473, %v1469
        %v2034 = vpack.c.bf16 %v1475, %v1471
        %v2035 = vpack.c.bf16 %v1481, %v1477
        %v2036 = vpack.c.bf16 %v1483, %v1479
        %v2037 = vpack.c.bf16 %v1489, %v1485
        %v2038 = vpack.c.bf16 %v1491, %v1487
        %v2039 = vpack.c.bf16 %v1497, %v1493
        %v2040 = vpack.c.bf16 %v1499, %v1495
        %v2041 = vpack.c.bf16 %v1505, %v1501
        %v2042 = vpack.c.bf16 %v1507, %v1503
        %v2043 = vpack.c.bf16 %v1513, %v1509
        %v2044 = vpack.c.bf16 %v1515, %v1511
        %v2045 = vpack.c.bf16 %v1521, %v1517
        %v2046 = vpack.c.bf16 %v1523, %v1519
        %v2047 = vpack.c.bf16 %v1529, %v1525
        %v2048 = vpack.c.bf16 %v1531, %v1527
        %v2049 = vpack.c.bf16 %v1537, %v1533
        %v2050 = vpack.c.bf16 %v1539, %v1535
        %v2051 = vpack.c.bf16 %v1545, %v1541
        %v2052 = vpack.c.bf16 %v1547, %v1543
        %v2053 = vpack.c.bf16 %v1553, %v1549
        %v2054 = vpack.c.bf16 %v1555, %v1551
        %v2055 = vpack.c.bf16 %v1561, %v1557
        %v2056 = vpack.c.bf16 %v1563, %v1559
        %v2057 = vpack.c.bf16 %v1569, %v1565
        %v2058 = vpack.c.bf16 %v1571, %v1567
        %v2059 = vpack.c.bf16 %v1577, %v1573
        %v2060 = vpack.c.bf16 %v1579, %v1575
        %v2061 = vld [vmem:[%s271] sm:$0xf]
        %v2062 = vld [vmem:[%s271 + $0x4] sm:$0xf]
        %v2063 = vld [vmem:[%s271 + $0x8] sm:$0xf]
        %v2064 = vld [vmem:[%s271 + $0xc] sm:$0xf]
        %v2065 = vld [vmem:[%s271 + $0x10] sm:$0xf]
        %v2066 = vld [vmem:[%s271 + $0x14] sm:$0xf]
        %v2067 = vld [vmem:[%s271 + $0x18] sm:$0xf]
        %v2068 = vld [vmem:[%s271 + $0x1c] sm:$0xf]
        %v2069 = vld [vmem:[%s271 + $0x20] sm:$0xf]
        %v2070 = vld [vmem:[%s271 + $0x24] sm:$0xf]
        %v2071 = vld [vmem:[%s271 + $0x28] sm:$0xf]
        %v2072 = vld [vmem:[%s271 + $0x2c] sm:$0xf]
        %v2073 = vld [vmem:[%s271 + $0x30] sm:$0xf]
        %v2074 = vld [vmem:[%s271 + $0x34] sm:$0xf]
        %v2075 = vld [vmem:[%s271 + $0x38] sm:$0xf]
        %v2076 = vld [vmem:[%s271 + $0x3c] sm:$0xf]
        %v2077 = vld [vmem:[%s271 + $0x40] sm:$0xf]
        %v2078 = vld [vmem:[%s271 + $0x44] sm:$0xf]
        %v2079 = vld [vmem:[%s271 + $0x48] sm:$0xf]
        %v2080 = vld [vmem:[%s271 + $0x4c] sm:$0xf]
        %v2081 = vld [vmem:[%s271 + $0x50] sm:$0xf]
        %v2082 = vld [vmem:[%s271 + $0x54] sm:$0xf]
        %v2083 = vld [vmem:[%s271 + $0x58] sm:$0xf]
        %v2084 = vld [vmem:[%s271 + $0x5c] sm:$0xf]
        %v2085 = vld [vmem:[%s271 + $0x60] sm:$0xf]
        %v2086 = vld [vmem:[%s271 + $0x64] sm:$0xf]
        %v2087 = vld [vmem:[%s271 + $0x68] sm:$0xf]
        %v2088 = vld [vmem:[%s271 + $0x6c] sm:$0xf]
        %v2089 = vld [vmem:[%s271 + $0x70] sm:$0xf]
        %v2090 = vld [vmem:[%s271 + $0x74] sm:$0xf]
        %v2091 = vld [vmem:[%s271 + $0x78] sm:$0xf]
        %v2092 = vld [vmem:[%s271 + $0x7c] sm:$0xf]
        %v2125 = vunpack.c.l.b16 %v2061
        %v2126 = vunpack.c.l.b16 %v2062
        %v2127 = vunpack.c.l.b16 %v2063
        %v2128 = vunpack.c.l.b16 %v2064
        %v2129 = vunpack.c.l.b16 %v2065
        %v2130 = vunpack.c.l.b16 %v2066
        %v2131 = vunpack.c.l.b16 %v2067
        %v2132 = vunpack.c.l.b16 %v2068
        %v2133 = vunpack.c.l.b16 %v2069
        %v2134 = vunpack.c.l.b16 %v2070
        %v2135 = vunpack.c.l.b16 %v2071
        %v2136 = vunpack.c.l.b16 %v2072
        %v2137 = vunpack.c.l.b16 %v2073
        %v2138 = vunpack.c.l.b16 %v2074
        %v2139 = vunpack.c.l.b16 %v2075
        %v2140 = vunpack.c.l.b16 %v2076
        %v2141 = vunpack.c.l.b16 %v2077
        %v2142 = vunpack.c.l.b16 %v2078
        %v2143 = vunpack.c.l.b16 %v2079
        %v2144 = vunpack.c.l.b16 %v2080
        %v2145 = vunpack.c.l.b16 %v2081
        %v2146 = vunpack.c.l.b16 %v2082
        %v2147 = vunpack.c.l.b16 %v2083
        %v2148 = vunpack.c.l.b16 %v2084
        %v2149 = vunpack.c.l.b16 %v2085
        %v2150 = vunpack.c.l.b16 %v2086
        %v2151 = vunpack.c.l.b16 %v2087
        %v2152 = vunpack.c.l.b16 %v2088
        %v2153 = vunpack.c.l.b16 %v2089
        %v2154 = vunpack.c.l.b16 %v2090
        %v2155 = vunpack.c.l.b16 %v2091
        %v2156 = vunpack.c.l.b16 %v2092
        %v2157 = vpack.c.b16 %v2126, %v2125
        %v2158 = vpack.c.b16 %v2128, %v2127
        %v2159 = vpack.c.b16 %v2130, %v2129
        %v2160 = vpack.c.b16 %v2132, %v2131
        %v2161 = vpack.c.b16 %v2134, %v2133
        %v2162 = vpack.c.b16 %v2136, %v2135
        %v2163 = vpack.c.b16 %v2138, %v2137
        %v2164 = vpack.c.b16 %v2140, %v2139
        %v2165 = vpack.c.b16 %v2142, %v2141
        %v2166 = vpack.c.b16 %v2144, %v2143
        %v2167 = vpack.c.b16 %v2146, %v2145
        %v2168 = vpack.c.b16 %v2148, %v2147
        %v2169 = vpack.c.b16 %v2150, %v2149
        %v2170 = vpack.c.b16 %v2152, %v2151
        %v2171 = vpack.c.b16 %v2154, %v2153
        %v2172 = vpack.c.b16 %v2156, %v2155
        %2189 = vmatpush.bf16.msra.mxu0 %v2164
        %2190 = vmatpush.bf16.msra.mxu0 %v2163
        %2191 = vmatpush.bf16.msra.mxu0 %v2162
        %2192 = vmatpush.bf16.msra.mxu0 %v2161
        %2193 = vmatpush.bf16.msra.mxu0 %v2160
        %2194 = vmatpush.bf16.msra.mxu0 %v2159
        %2195 = vmatpush.bf16.msra.mxu0 %v2158
        %2196 = vmatpush.bf16.msra.mxu0 %v2157
        %2197 = vmatmul.bf16.gmra.mxu0 %v2029
        %v2198 = vpop.f32.mrf.mxu0
        %v2199 = vadd.f32 0.0, %v2198
        %v2200 = vpop.f32.mrf.mxu0
        %v2201 = vadd.f32 0.0, %v2200
        %2202 = vmatmul.bf16.gmra.mxu0 %v2031
        %v2203 = vpop.f32.mrf.mxu0
        %v2204 = vadd.f32 0.0, %v2203
        %v2205 = vpop.f32.mrf.mxu0
        %v2206 = vadd.f32 0.0, %v2205
        %2207 = vmatmul.bf16.gmra.mxu0 %v2033
        %v2208 = vpop.f32.mrf.mxu0
        %v2209 = vadd.f32 0.0, %v2208
        %v2210 = vpop.f32.mrf.mxu0
        %v2211 = vadd.f32 0.0, %v2210
        %2212 = vmatmul.bf16.gmra.mxu0 %v2035
        %v2213 = vpop.f32.mrf.mxu0
        %v2214 = vadd.f32 0.0, %v2213
        %v2215 = vpop.f32.mrf.mxu0
        %v2216 = vadd.f32 0.0, %v2215
        %2217 = vmatmul.bf16.gmra.mxu0 %v2037
        %v2218 = vpop.f32.mrf.mxu0
        %v2219 = vadd.f32 0.0, %v2218
        %v2220 = vpop.f32.mrf.mxu0
        %v2221 = vadd.f32 0.0, %v2220
        %2222 = vmatmul.bf16.gmra.mxu0 %v2039
        %v2223 = vpop.f32.mrf.mxu0
        %v2224 = vadd.f32 0.0, %v2223
        %v2225 = vpop.f32.mrf.mxu0
        %v2226 = vadd.f32 0.0, %v2225
        %2227 = vmatmul.bf16.gmra.mxu0 %v2041
        %v2228 = vpop.f32.mrf.mxu0
        %v2229 = vadd.f32 0.0, %v2228
        %v2230 = vpop.f32.mrf.mxu0
        %v2231 = vadd.f32 0.0, %v2230
        %2232 = vmatmul.bf16.gmra.mxu0 %v2043
        %v2233 = vpop.f32.mrf.mxu0
        %v2234 = vadd.f32 0.0, %v2233
        %v2235 = vpop.f32.mrf.mxu0
        %v2236 = vadd.f32 0.0, %v2235
        %2237 = vmatmul.bf16.gmra.mxu0 %v2045
        %v2238 = vpop.f32.mrf.mxu0
        %v2239 = vadd.f32 0.0, %v2238
        %v2240 = vpop.f32.mrf.mxu0
        %v2241 = vadd.f32 0.0, %v2240
        %2242 = vmatmul.bf16.gmra.mxu0 %v2047
        %v2243 = vpop.f32.mrf.mxu0
        %v2244 = vadd.f32 0.0, %v2243
        %v2245 = vpop.f32.mrf.mxu0
        %v2246 = vadd.f32 0.0, %v2245
        %2247 = vmatmul.bf16.gmra.mxu0 %v2049
        %v2248 = vpop.f32.mrf.mxu0
        %v2249 = vadd.f32 0.0, %v2248
        %v2250 = vpop.f32.mrf.mxu0
        %v2251 = vadd.f32 0.0, %v2250
        %2252 = vmatmul.bf16.gmra.mxu0 %v2051
        %v2253 = vpop.f32.mrf.mxu0
        %v2254 = vadd.f32 0.0, %v2253
        %v2255 = vpop.f32.mrf.mxu0
        %v2256 = vadd.f32 0.0, %v2255
        %2257 = vmatmul.bf16.gmra.mxu0 %v2053
        %v2258 = vpop.f32.mrf.mxu0
        %v2259 = vadd.f32 0.0, %v2258
        %v2260 = vpop.f32.mrf.mxu0
        %v2261 = vadd.f32 0.0, %v2260
        %2262 = vmatmul.bf16.gmra.mxu0 %v2055
        %v2263 = vpop.f32.mrf.mxu0
        %v2264 = vadd.f32 0.0, %v2263
        %v2265 = vpop.f32.mrf.mxu0
        %v2266 = vadd.f32 0.0, %v2265
        %2267 = vmatmul.bf16.gmra.mxu0 %v2057
        %v2268 = vpop.f32.mrf.mxu0
        %v2269 = vadd.f32 0.0, %v2268
        %v2270 = vpop.f32.mrf.mxu0
        %v2271 = vadd.f32 0.0, %v2270
        %2272 = vmatmul.bf16.gmra.mxu0 %v2059
        %v2273 = vpop.f32.mrf.mxu0
        %v2274 = vadd.f32 0.0, %v2273
        %v2275 = vpop.f32.mrf.mxu0
        %v2276 = vadd.f32 0.0, %v2275
        %2277 = vdwg.mxu0
        %2278 = vmatpush.bf16.msra.mxu0 %v2172
        %2279 = vmatpush.bf16.msra.mxu0 %v2171
        %2280 = vmatpush.bf16.msra.mxu0 %v2170
        %2281 = vmatpush.bf16.msra.mxu0 %v2169
        %2282 = vmatpush.bf16.msra.mxu0 %v2168
        %2283 = vmatpush.bf16.msra.mxu0 %v2167
        %2284 = vmatpush.bf16.msra.mxu0 %v2166
        %2285 = vmatpush.bf16.msra.mxu0 %v2165
        %2286 = vmatmul.bf16.gmra.mxu0 %v2030
        %v2287 = vpop.f32.mrf.mxu0
        %v2288 = vadd.f32 %v2199, %v2287
        %v2289 = vpop.f32.mrf.mxu0
        %v2290 = vadd.f32 %v2201, %v2289
        %2291 = vmatmul.bf16.gmra.mxu0 %v2032
        %v2292 = vpop.f32.mrf.mxu0
        %v2293 = vadd.f32 %v2204, %v2292
        %v2294 = vpop.f32.mrf.mxu0
        %v2295 = vadd.f32 %v2206, %v2294
        %2296 = vmatmul.bf16.gmra.mxu0 %v2034
        %v2297 = vpop.f32.mrf.mxu0
        %v2298 = vadd.f32 %v2209, %v2297
        %v2299 = vpop.f32.mrf.mxu0
        %v2300 = vadd.f32 %v2211, %v2299
        %2301 = vmatmul.bf16.gmra.mxu0 %v2036
        %v2302 = vpop.f32.mrf.mxu0
        %v2303 = vadd.f32 %v2214, %v2302
        %v2304 = vpop.f32.mrf.mxu0
        %v2305 = vadd.f32 %v2216, %v2304
        %2306 = vmatmul.bf16.gmra.mxu0 %v2038
        %v2307 = vpop.f32.mrf.mxu0
        %v2308 = vadd.f32 %v2219, %v2307
        %v2309 = vpop.f32.mrf.mxu0
        %v2310 = vadd.f32 %v2221, %v2309
        %2311 = vmatmul.bf16.gmra.mxu0 %v2040
        %v2312 = vpop.f32.mrf.mxu0
        %v2313 = vadd.f32 %v2224, %v2312
        %v2314 = vpop.f32.mrf.mxu0
        %v2315 = vadd.f32 %v2226, %v2314
        %2316 = vmatmul.bf16.gmra.mxu0 %v2042
        %v2317 = vpop.f32.mrf.mxu0
        %v2318 = vadd.f32 %v2229, %v2317
        %v2319 = vpop.f32.mrf.mxu0
        %v2320 = vadd.f32 %v2231, %v2319
        %2321 = vmatmul.bf16.gmra.mxu0 %v2044
        %v2322 = vpop.f32.mrf.mxu0
        %v2323 = vadd.f32 %v2234, %v2322
        %v2324 = vpop.f32.mrf.mxu0
        %v2325 = vadd.f32 %v2236, %v2324
        %2326 = vmatmul.bf16.gmra.mxu0 %v2046
        %v2327 = vpop.f32.mrf.mxu0
        %v2328 = vadd.f32 %v2239, %v2327
        %v2329 = vpop.f32.mrf.mxu0
        %v2330 = vadd.f32 %v2241, %v2329
        %2331 = vmatmul.bf16.gmra.mxu0 %v2048
        %v2332 = vpop.f32.mrf.mxu0
        %v2333 = vadd.f32 %v2244, %v2332
        %v2334 = vpop.f32.mrf.mxu0
        %v2335 = vadd.f32 %v2246, %v2334
        %2336 = vmatmul.bf16.gmra.mxu0 %v2050
        %v2337 = vpop.f32.mrf.mxu0
        %v2338 = vadd.f32 %v2249, %v2337
        %v2339 = vpop.f32.mrf.mxu0
        %v2340 = vadd.f32 %v2251, %v2339
        %2341 = vmatmul.bf16.gmra.mxu0 %v2052
        %v2342 = vpop.f32.mrf.mxu0
        %v2343 = vadd.f32 %v2254, %v2342
        %v2344 = vpop.f32.mrf.mxu0
        %v2345 = vadd.f32 %v2256, %v2344
        %2346 = vmatmul.bf16.gmra.mxu0 %v2054
        %v2347 = vpop.f32.mrf.mxu0
        %v2348 = vadd.f32 %v2259, %v2347
        %v2349 = vpop.f32.mrf.mxu0
        %v2350 = vadd.f32 %v2261, %v2349
        %2351 = vmatmul.bf16.gmra.mxu0 %v2056
        %v2352 = vpop.f32.mrf.mxu0
        %v2353 = vadd.f32 %v2264, %v2352
        %v2354 = vpop.f32.mrf.mxu0
        %v2355 = vadd.f32 %v2266, %v2354
        %2356 = vmatmul.bf16.gmra.mxu0 %v2058
        %v2357 = vpop.f32.mrf.mxu0
        %v2358 = vadd.f32 %v2269, %v2357
        %v2359 = vpop.f32.mrf.mxu0
        %v2360 = vadd.f32 %v2271, %v2359
        %2361 = vmatmul.bf16.gmra.mxu0 %v2060
        %v2362 = vpop.f32.mrf.mxu0
        %v2363 = vadd.f32 %v2274, %v2362
        %v2364 = vpop.f32.mrf.mxu0
        %v2365 = vadd.f32 %v2276, %v2364
        %2366 = vdwg.mxu0
        %v2367 = vadd.f32 %v1997, %v2288
        %v2368 = vadd.f32 %v1998, %v2290
        %v2369 = vadd.f32 %v1999, %v2293
        %v2370 = vadd.f32 %v2000, %v2295
        %v2371 = vadd.f32 %v2001, %v2298
        %v2372 = vadd.f32 %v2002, %v2300
        %v2373 = vadd.f32 %v2003, %v2303
        %v2374 = vadd.f32 %v2004, %v2305
        %v2375 = vadd.f32 %v2005, %v2308
        %v2376 = vadd.f32 %v2006, %v2310
        %v2377 = vadd.f32 %v2007, %v2313
        %v2378 = vadd.f32 %v2008, %v2315
        %v2379 = vadd.f32 %v2009, %v2318
        %v2380 = vadd.f32 %v2010, %v2320
        %v2381 = vadd.f32 %v2011, %v2323
        %v2382 = vadd.f32 %v2012, %v2325
        %v2383 = vadd.f32 %v2013, %v2328
        %v2384 = vadd.f32 %v2014, %v2330
        %v2385 = vadd.f32 %v2015, %v2333
        %v2386 = vadd.f32 %v2016, %v2335
        %v2387 = vadd.f32 %v2017, %v2338
        %v2388 = vadd.f32 %v2018, %v2340
        %v2389 = vadd.f32 %v2019, %v2343
        %v2390 = vadd.f32 %v2020, %v2345
        %v2391 = vadd.f32 %v2021, %v2348
        %v2392 = vadd.f32 %v2022, %v2350
        %v2393 = vadd.f32 %v2023, %v2353
        %v2394 = vadd.f32 %v2024, %v2355
        %v2395 = vadd.f32 %v2025, %v2358
        %v2396 = vadd.f32 %v2026, %v2360
        %v2397 = vadd.f32 %v2027, %v2363
        %v2398 = vadd.f32 %v2028, %v2365
        %2399 = vst [vmem:[#allocation4] sm:$0xff] %v2367
        %2400 = vst [vmem:[#allocation4 + $0x8] sm:$0xff] %v2368
        %2401 = vst [vmem:[#allocation4 + $0x10] sm:$0xff] %v2369
        %2402 = vst [vmem:[#allocation4 + $0x18] sm:$0xff] %v2370
        %2403 = vst [vmem:[#allocation4 + $0x20] sm:$0xff] %v2371
        %2404 = vst [vmem:[#allocation4 + $0x28] sm:$0xff] %v2372
        %2405 = vst [vmem:[#allocation4 + $0x30] sm:$0xff] %v2373
        %2406 = vst [vmem:[#allocation4 + $0x38] sm:$0xff] %v2374
        %2407 = vst [vmem:[#allocation4 + $0x40] sm:$0xff] %v2375
        %2408 = vst [vmem:[#allocation4 + $0x48] sm:$0xff] %v2376
        %2409 = vst [vmem:[#allocation4 + $0x50] sm:$0xff] %v2377
        %2410 = vst [vmem:[#allocation4 + $0x58] sm:$0xff] %v2378
        %2411 = vst [vmem:[#allocation4 + $0x60] sm:$0xff] %v2379
        %2412 = vst [vmem:[#allocation4 + $0x68] sm:$0xff] %v2380
        %2413 = vst [vmem:[#allocation4 + $0x70] sm:$0xff] %v2381
        %2414 = vst [vmem:[#allocation4 + $0x78] sm:$0xff] %v2382
        %2415 = vst [vmem:[#allocation4 + $0x80] sm:$0xff] %v2383
        %2416 = vst [vmem:[#allocation4 + $0x88] sm:$0xff] %v2384
        %2417 = vst [vmem:[#allocation4 + $0x90] sm:$0xff] %v2385
        %2418 = vst [vmem:[#allocation4 + $0x98] sm:$0xff] %v2386
        %2419 = vst [vmem:[#allocation4 + $0xa0] sm:$0xff] %v2387
        %2420 = vst [vmem:[#allocation4 + $0xa8] sm:$0xff] %v2388
        %2421 = vst [vmem:[#allocation4 + $0xb0] sm:$0xff] %v2389
        %2422 = vst [vmem:[#allocation4 + $0xb8] sm:$0xff] %v2390
        %2423 = vst [vmem:[#allocation4 + $0xc0] sm:$0xff] %v2391
        %2424 = vst [vmem:[#allocation4 + $0xc8] sm:$0xff] %v2392
        %2425 = vst [vmem:[#allocation4 + $0xd0] sm:$0xff] %v2393
        %2426 = vst [vmem:[#allocation4 + $0xd8] sm:$0xff] %v2394
        %2427 = vst [vmem:[#allocation4 + $0xe0] sm:$0xff] %v2395
        %2428 = vst [vmem:[#allocation4 + $0xe8] sm:$0xff] %v2396
        %2429 = vst [vmem:[#allocation4 + $0xf0] sm:$0xff] %v2397
        %2430 = vst [vmem:[#allocation4 + $0xf8] sm:$0xff] %v2398
        %2431 = vst.msk [vmem:[#allocation2] sm:$0xff] %vm1772, %v1100
        %2432 = vst.msk [vmem:[#allocation2 + $0x8] sm:$0xff] %vm1772, %v1101
        %2433 = vst.msk [vmem:[#allocation2 + $0x10] sm:$0xff] %vm1772, %v1102
        %2434 = vst.msk [vmem:[#allocation2 + $0x18] sm:$0xff] %vm1772, %v1103
        %2435 = vst.msk [vmem:[#allocation2 + $0x20] sm:$0xff] %vm1772, %v1104
        %2436 = vst.msk [vmem:[#allocation2 + $0x28] sm:$0xff] %vm1772, %v1105
        %2437 = vst.msk [vmem:[#allocation2 + $0x30] sm:$0xff] %vm1772, %v1106
        %2438 = vst.msk [vmem:[#allocation2 + $0x38] sm:$0xff] %vm1772, %v1107
        %2439 = vst.msk [vmem:[#allocation2 + $0x40] sm:$0xff] %vm1772, %v1108
        %2440 = vst.msk [vmem:[#allocation2 + $0x48] sm:$0xff] %vm1772, %v1109
        %2441 = vst.msk [vmem:[#allocation2 + $0x50] sm:$0xff] %vm1772, %v1110
        %2442 = vst.msk [vmem:[#allocation2 + $0x58] sm:$0xff] %vm1772, %v1111
        %2443 = vst.msk [vmem:[#allocation2 + $0x60] sm:$0xff] %vm1772, %v1112
        %2444 = vst.msk [vmem:[#allocation2 + $0x68] sm:$0xff] %vm1772, %v1113
        %2445 = vst.msk [vmem:[#allocation2 + $0x70] sm:$0xff] %vm1772, %v1114
        %2446 = vst.msk [vmem:[#allocation2 + $0x78] sm:$0xff] %vm1772, %v1115
        %2447 = vst.msk [vmem:[#allocation2 + $0x80] sm:$0xff] %vm1772, %v1116
        %2448 = vst.msk [vmem:[#allocation2 + $0x88] sm:$0xff] %vm1772, %v1117
        %2449 = vst.msk [vmem:[#allocation2 + $0x90] sm:$0xff] %vm1772, %v1118
        %2450 = vst.msk [vmem:[#allocation2 + $0x98] sm:$0xff] %vm1772, %v1119
        %2451 = vst.msk [vmem:[#allocation2 + $0xa0] sm:$0xff] %vm1772, %v1120
        %2452 = vst.msk [vmem:[#allocation2 + $0xa8] sm:$0xff] %vm1772, %v1121
        %2453 = vst.msk [vmem:[#allocation2 + $0xb0] sm:$0xff] %vm1772, %v1122
        %2454 = vst.msk [vmem:[#allocation2 + $0xb8] sm:$0xff] %vm1772, %v1123
        %2455 = vst.msk [vmem:[#allocation2 + $0xc0] sm:$0xff] %vm1772, %v1124
        %2456 = vst.msk [vmem:[#allocation2 + $0xc8] sm:$0xff] %vm1772, %v1125
        %2457 = vst.msk [vmem:[#allocation2 + $0xd0] sm:$0xff] %vm1772, %v1126
        %2458 = vst.msk [vmem:[#allocation2 + $0xd8] sm:$0xff] %vm1772, %v1127
        %2459 = vst.msk [vmem:[#allocation2 + $0xe0] sm:$0xff] %vm1772, %v1128
        %2460 = vst.msk [vmem:[#allocation2 + $0xe8] sm:$0xff] %vm1772, %v1129
        %2461 = vst.msk [vmem:[#allocation2 + $0xf0] sm:$0xff] %vm1772, %v1130
        %2462 = vst.msk [vmem:[#allocation2 + $0xf8] sm:$0xff] %vm1772, %v1131
        // Predicated region
        $region49: #{tpu_custom_call.1} parent=31 // pred_check
          %p2463 = pneg %p309
        $region50: #{tpu_custom_call.1} parent=31 // pred_check_branch
          %2465 = sbr.rel (%p2463) target = $region52
        $region51: #{tpu_custom_call.1} parent=31 // pred_region
          %v2466 = vld [vmem:[#allocation4] sm:$0xff]
          %v2467 = vld [vmem:[#allocation4 + $0x8] sm:$0xff]
          %v2468 = vld [vmem:[#allocation4 + $0x10] sm:$0xff]
          %v2469 = vld [vmem:[#allocation4 + $0x18] sm:$0xff]
          %v2470 = vld [vmem:[#allocation4 + $0x20] sm:$0xff]
          %v2471 = vld [vmem:[#allocation4 + $0x28] sm:$0xff]
          %v2472 = vld [vmem:[#allocation4 + $0x30] sm:$0xff]
          %v2473 = vld [vmem:[#allocation4 + $0x38] sm:$0xff]
          %v2474 = vld [vmem:[#allocation4 + $0x40] sm:$0xff]
          %v2475 = vld [vmem:[#allocation4 + $0x48] sm:$0xff]
          %v2476 = vld [vmem:[#allocation4 + $0x50] sm:$0xff]
          %v2477 = vld [vmem:[#allocation4 + $0x58] sm:$0xff]
          %v2478 = vld [vmem:[#allocation4 + $0x60] sm:$0xff]
          %v2479 = vld [vmem:[#allocation4 + $0x68] sm:$0xff]
          %v2480 = vld [vmem:[#allocation4 + $0x70] sm:$0xff]
          %v2481 = vld [vmem:[#allocation4 + $0x78] sm:$0xff]
          %v2482 = vld [vmem:[#allocation4 + $0x80] sm:$0xff]
          %v2483 = vld [vmem:[#allocation4 + $0x88] sm:$0xff]
          %v2484 = vld [vmem:[#allocation4 + $0x90] sm:$0xff]
          %v2485 = vld [vmem:[#allocation4 + $0x98] sm:$0xff]
          %v2486 = vld [vmem:[#allocation4 + $0xa0] sm:$0xff]
          %v2487 = vld [vmem:[#allocation4 + $0xa8] sm:$0xff]
          %v2488 = vld [vmem:[#allocation4 + $0xb0] sm:$0xff]
          %v2489 = vld [vmem:[#allocation4 + $0xb8] sm:$0xff]
          %v2490 = vld [vmem:[#allocation4 + $0xc0] sm:$0xff]
          %v2491 = vld [vmem:[#allocation4 + $0xc8] sm:$0xff]
          %v2492 = vld [vmem:[#allocation4 + $0xd0] sm:$0xff]
          %v2493 = vld [vmem:[#allocation4 + $0xd8] sm:$0xff]
          %v2494 = vld [vmem:[#allocation4 + $0xe0] sm:$0xff]
          %v2495 = vld [vmem:[#allocation4 + $0xe8] sm:$0xff]
          %v2496 = vld [vmem:[#allocation4 + $0xf0] sm:$0xff]
          %v2497 = vld [vmem:[#allocation4 + $0xf8] sm:$0xff]
          %v2498 = vld [vmem:[#allocation3] sm:$0xff]
          %v2499 = vld [vmem:[#allocation3 + $0x8] sm:$0xff]
          %v2500 = vld [vmem:[#allocation3 + $0x10] sm:$0xff]
          %v2501 = vld [vmem:[#allocation3 + $0x18] sm:$0xff]
          %v2502 = vld [vmem:[#allocation3 + $0x20] sm:$0xff]
          %v2503 = vld [vmem:[#allocation3 + $0x28] sm:$0xff]
          %v2504 = vld [vmem:[#allocation3 + $0x30] sm:$0xff]
          %v2505 = vld [vmem:[#allocation3 + $0x38] sm:$0xff]
          %v2506 = vld [vmem:[#allocation3 + $0x40] sm:$0xff]
          %v2507 = vld [vmem:[#allocation3 + $0x48] sm:$0xff]
          %v2508 = vld [vmem:[#allocation3 + $0x50] sm:$0xff]
          %v2509 = vld [vmem:[#allocation3 + $0x58] sm:$0xff]
          %v2510 = vld [vmem:[#allocation3 + $0x60] sm:$0xff]
          %v2511 = vld [vmem:[#allocation3 + $0x68] sm:$0xff]
          %v2512 = vld [vmem:[#allocation3 + $0x70] sm:$0xff]
          %v2513 = vld [vmem:[#allocation3 + $0x78] sm:$0xff]
          %v2514 = vld [vmem:[#allocation3 + $0x80] sm:$0xff]
          %v2515 = vld [vmem:[#allocation3 + $0x88] sm:$0xff]
          %v2516 = vld [vmem:[#allocation3 + $0x90] sm:$0xff]
          %v2517 = vld [vmem:[#allocation3 + $0x98] sm:$0xff]
          %v2518 = vld [vmem:[#allocation3 + $0xa0] sm:$0xff]
          %v2519 = vld [vmem:[#allocation3 + $0xa8] sm:$0xff]
          %v2520 = vld [vmem:[#allocation3 + $0xb0] sm:$0xff]
          %v2521 = vld [vmem:[#allocation3 + $0xb8] sm:$0xff]
          %v2522 = vld [vmem:[#allocation3 + $0xc0] sm:$0xff]
          %v2523 = vld [vmem:[#allocation3 + $0xc8] sm:$0xff]
          %v2524 = vld [vmem:[#allocation3 + $0xd0] sm:$0xff]
          %v2525 = vld [vmem:[#allocation3 + $0xd8] sm:$0xff]
          %v2526 = vld [vmem:[#allocation3 + $0xe0] sm:$0xff]
          %v2527 = vld [vmem:[#allocation3 + $0xe8] sm:$0xff]
          %v2528 = vld [vmem:[#allocation3 + $0xf0] sm:$0xff]
          %v2529 = vld [vmem:[#allocation3 + $0xf8] sm:$0xff]
          %v2530 = vrcp.pop %v2498
          %v2531 = vrcp.pop %v2499
          %v2532 = vrcp.pop %v2500
          %v2533 = vrcp.pop %v2501
          %v2534 = vrcp.pop %v2502
          %v2535 = vrcp.pop %v2503
          %v2536 = vrcp.pop %v2504
          %v2537 = vrcp.pop %v2505
          %v2538 = vrcp.pop %v2506
          %v2539 = vrcp.pop %v2507
          %v2540 = vrcp.pop %v2508
          %v2541 = vrcp.pop %v2509
          %v2542 = vrcp.pop %v2510
          %v2543 = vrcp.pop %v2511
          %v2544 = vrcp.pop %v2512
          %v2545 = vrcp.pop %v2513
          %v2546 = vrcp.pop %v2514
          %v2547 = vrcp.pop %v2515
          %v2548 = vrcp.pop %v2516
          %v2549 = vrcp.pop %v2517
          %v2550 = vrcp.pop %v2518
          %v2551 = vrcp.pop %v2519
          %v2552 = vrcp.pop %v2520
          %v2553 = vrcp.pop %v2521
          %v2554 = vrcp.pop %v2522
          %v2555 = vrcp.pop %v2523
          %v2556 = vrcp.pop %v2524
          %v2557 = vrcp.pop %v2525
          %v2558 = vrcp.pop %v2526
          %v2559 = vrcp.pop %v2527
          %v2560 = vrcp.pop %v2528
          %v2561 = vrcp.pop %v2529
          %2563 = vset.pattern.permute.xlu0 0
          %2564 = vperm.xlu0 %2563, %v2530
          %v2565 = vpop.permute.xlu0 %2564
          %2568 = vset.pattern.permute.xlu0 0
          %2569 = vperm.xlu0 %2568, %v2531
          %v2570 = vpop.permute.xlu0 %2569
          %2573 = vset.pattern.permute.xlu0 0
          %2574 = vperm.xlu0 %2573, %v2532
          %v2575 = vpop.permute.xlu0 %2574
          %2578 = vset.pattern.permute.xlu0 0
          %2579 = vperm.xlu0 %2578, %v2533
          %v2580 = vpop.permute.xlu0 %2579
          %2583 = vset.pattern.permute.xlu0 0
          %2584 = vperm.xlu0 %2583, %v2534
          %v2585 = vpop.permute.xlu0 %2584
          %2588 = vset.pattern.permute.xlu0 0
          %2589 = vperm.xlu0 %2588, %v2535
          %v2590 = vpop.permute.xlu0 %2589
          %2593 = vset.pattern.permute.xlu0 0
          %2594 = vperm.xlu0 %2593, %v2536
          %v2595 = vpop.permute.xlu0 %2594
          %2598 = vset.pattern.permute.xlu0 0
          %2599 = vperm.xlu0 %2598, %v2537
          %v2600 = vpop.permute.xlu0 %2599
          %2603 = vset.pattern.permute.xlu0 0
          %2604 = vperm.xlu0 %2603, %v2538
          %v2605 = vpop.permute.xlu0 %2604
          %2608 = vset.pattern.permute.xlu0 0
          %2609 = vperm.xlu0 %2608, %v2539
          %v2610 = vpop.permute.xlu0 %2609
          %2613 = vset.pattern.permute.xlu0 0
          %2614 = vperm.xlu0 %2613, %v2540
          %v2615 = vpop.permute.xlu0 %2614
          %2618 = vset.pattern.permute.xlu0 0
          %2619 = vperm.xlu0 %2618, %v2541
          %v2620 = vpop.permute.xlu0 %2619
          %2623 = vset.pattern.permute.xlu0 0
          %2624 = vperm.xlu0 %2623, %v2542
          %v2625 = vpop.permute.xlu0 %2624
          %2628 = vset.pattern.permute.xlu0 0
          %2629 = vperm.xlu0 %2628, %v2543
          %v2630 = vpop.permute.xlu0 %2629
          %2633 = vset.pattern.permute.xlu0 0
          %2634 = vperm.xlu0 %2633, %v2544
          %v2635 = vpop.permute.xlu0 %2634
          %2638 = vset.pattern.permute.xlu0 0
          %2639 = vperm.xlu0 %2638, %v2545
          %v2640 = vpop.permute.xlu0 %2639
          %2643 = vset.pattern.permute.xlu0 0
          %2644 = vperm.xlu0 %2643, %v2546
          %v2645 = vpop.permute.xlu0 %2644
          %2648 = vset.pattern.permute.xlu0 0
          %2649 = vperm.xlu0 %2648, %v2547
          %v2650 = vpop.permute.xlu0 %2649
          %2653 = vset.pattern.permute.xlu0 0
          %2654 = vperm.xlu0 %2653, %v2548
          %v2655 = vpop.permute.xlu0 %2654
          %2658 = vset.pattern.permute.xlu0 0
          %2659 = vperm.xlu0 %2658, %v2549
          %v2660 = vpop.permute.xlu0 %2659
          %2663 = vset.pattern.permute.xlu0 0
          %2664 = vperm.xlu0 %2663, %v2550
          %v2665 = vpop.permute.xlu0 %2664
          %2668 = vset.pattern.permute.xlu0 0
          %2669 = vperm.xlu0 %2668, %v2551
          %v2670 = vpop.permute.xlu0 %2669
          %2673 = vset.pattern.permute.xlu0 0
          %2674 = vperm.xlu0 %2673, %v2552
          %v2675 = vpop.permute.xlu0 %2674
          %2678 = vset.pattern.permute.xlu0 0
          %2679 = vperm.xlu0 %2678, %v2553
          %v2680 = vpop.permute.xlu0 %2679
          %2683 = vset.pattern.permute.xlu0 0
          %2684 = vperm.xlu0 %2683, %v2554
          %v2685 = vpop.permute.xlu0 %2684
          %2688 = vset.pattern.permute.xlu0 0
          %2689 = vperm.xlu0 %2688, %v2555
          %v2690 = vpop.permute.xlu0 %2689
          %2693 = vset.pattern.permute.xlu0 0
          %2694 = vperm.xlu0 %2693, %v2556
          %v2695 = vpop.permute.xlu0 %2694
          %2698 = vset.pattern.permute.xlu0 0
          %2699 = vperm.xlu0 %2698, %v2557
          %v2700 = vpop.permute.xlu0 %2699
          %2703 = vset.pattern.permute.xlu0 0
          %2704 = vperm.xlu0 %2703, %v2558
          %v2705 = vpop.permute.xlu0 %2704
          %2708 = vset.pattern.permute.xlu0 0
          %2709 = vperm.xlu0 %2708, %v2559
          %v2710 = vpop.permute.xlu0 %2709
          %2713 = vset.pattern.permute.xlu0 0
          %2714 = vperm.xlu0 %2713, %v2560
          %v2715 = vpop.permute.xlu0 %2714
          %2718 = vset.pattern.permute.xlu0 0
          %2719 = vperm.xlu0 %2718, %v2561
          %v2720 = vpop.permute.xlu0 %2719
          %v2722 = vmul.f32 %v2466, %v2565
          %v2723 = vmul.f32 %v2467, %v2570
          %v2724 = vmul.f32 %v2468, %v2575
          %v2725 = vmul.f32 %v2469, %v2580
          %v2726 = vmul.f32 %v2470, %v2585
          %v2727 = vmul.f32 %v2471, %v2590
          %v2728 = vmul.f32 %v2472, %v2595
          %v2729 = vmul.f32 %v2473, %v2600
          %v2730 = vmul.f32 %v2474, %v2605
          %v2731 = vmul.f32 %v2475, %v2610
          %v2732 = vmul.f32 %v2476, %v2615
          %v2733 = vmul.f32 %v2477, %v2620
          %v2734 = vmul.f32 %v2478, %v2625
          %v2735 = vmul.f32 %v2479, %v2630
          %v2736 = vmul.f32 %v2480, %v2635
          %v2737 = vmul.f32 %v2481, %v2640
          %v2738 = vmul.f32 %v2482, %v2645
          %v2739 = vmul.f32 %v2483, %v2650
          %v2740 = vmul.f32 %v2484, %v2655
          %v2741 = vmul.f32 %v2485, %v2660
          %v2742 = vmul.f32 %v2486, %v2665
          %v2743 = vmul.f32 %v2487, %v2670
          %v2744 = vmul.f32 %v2488, %v2675
          %v2745 = vmul.f32 %v2489, %v2680
          %v2746 = vmul.f32 %v2490, %v2685
          %v2747 = vmul.f32 %v2491, %v2690
          %v2748 = vmul.f32 %v2492, %v2695
          %v2749 = vmul.f32 %v2493, %v2700
          %v2750 = vmul.f32 %v2494, %v2705
          %v2751 = vmul.f32 %v2495, %v2710
          %v2752 = vmul.f32 %v2496, %v2715
          %v2753 = vmul.f32 %v2497, %v2720
          %2754 = vst [vmem:[%s304] sm:$0xff] %v2722
          %2755 = vst [vmem:[%s304 + $0x8] sm:$0xff] %v2723
          %2756 = vst [vmem:[%s304 + $0x10] sm:$0xff] %v2724
          %2757 = vst [vmem:[%s304 + $0x18] sm:$0xff] %v2725
          %2758 = vst [vmem:[%s304 + $0x20] sm:$0xff] %v2726
          %2759 = vst [vmem:[%s304 + $0x28] sm:$0xff] %v2727
          %2760 = vst [vmem:[%s304 + $0x30] sm:$0xff] %v2728
          %2761 = vst [vmem:[%s304 + $0x38] sm:$0xff] %v2729
          %2762 = vst [vmem:[%s304 + $0x40] sm:$0xff] %v2730
          %2763 = vst [vmem:[%s304 + $0x48] sm:$0xff] %v2731
          %2764 = vst [vmem:[%s304 + $0x50] sm:$0xff] %v2732
          %2765 = vst [vmem:[%s304 + $0x58] sm:$0xff] %v2733
          %2766 = vst [vmem:[%s304 + $0x60] sm:$0xff] %v2734
          %2767 = vst [vmem:[%s304 + $0x68] sm:$0xff] %v2735
          %2768 = vst [vmem:[%s304 + $0x70] sm:$0xff] %v2736
          %2769 = vst [vmem:[%s304 + $0x78] sm:$0xff] %v2737
          %2770 = vst [vmem:[%s304 + $0x80] sm:$0xff] %v2738
          %2771 = vst [vmem:[%s304 + $0x88] sm:$0xff] %v2739
          %2772 = vst [vmem:[%s304 + $0x90] sm:$0xff] %v2740
          %2773 = vst [vmem:[%s304 + $0x98] sm:$0xff] %v2741
          %2774 = vst [vmem:[%s304 + $0xa0] sm:$0xff] %v2742
          %2775 = vst [vmem:[%s304 + $0xa8] sm:$0xff] %v2743
          %2776 = vst [vmem:[%s304 + $0xb0] sm:$0xff] %v2744
          %2777 = vst [vmem:[%s304 + $0xb8] sm:$0xff] %v2745
          %2778 = vst [vmem:[%s304 + $0xc0] sm:$0xff] %v2746
          %2779 = vst [vmem:[%s304 + $0xc8] sm:$0xff] %v2747
          %2780 = vst [vmem:[%s304 + $0xd0] sm:$0xff] %v2748
          %2781 = vst [vmem:[%s304 + $0xd8] sm:$0xff] %v2749
          %2782 = vst [vmem:[%s304 + $0xe0] sm:$0xff] %v2750
          %2783 = vst [vmem:[%s304 + $0xe8] sm:$0xff] %v2751
          %2784 = vst [vmem:[%s304 + $0xf0] sm:$0xff] %v2752
          %2785 = vst [vmem:[%s304 + $0xf8] sm:$0xff] %v2753
        $region52: #{tpu_custom_call.1} parent=31 // pred_fallthru
          _
        %s2786 = sand.u32 %s136, 1
        %s2787 = scalar_lea.sflag [#allocation8], %s2786
        %s2788 = sand.u32 %s136, 1
        %s2789 = smul.addr %s2788, 256
        %s2790 = scalar_lea.vmem [#allocation12], %s2789
        // Predicated region
        $region53: #{tpu_custom_call.1} parent=31 // pred_check
          %p2791 = pneg %p146
        $region54: #{tpu_custom_call.1} parent=31 // pred_check_branch
          %2793 = sbr.rel (%p2791) target = $region56
        $region55: #{tpu_custom_call.1} parent=31 // pred_region
          %s2794 = smul.u32 32, %s29
          %2796 = vsyncadd %s2787, 0
          %s2797 = smul.addr %s28, 32
          %s2798 = sadd.s32 %s2794, %s2797
          %s2799 = smul.addr %s2798, 8
          %s2800 = scalar_lea.hbm %s3, %s2799
          %s2801 = sshll.u32 %s2790, 4
          %s2802 = int_to_ptr.vmem [resolvable:$true] %s2801
          %s2803 = sshll.u32 %s2800, 4
          %s2804 = int_to_ptr.hbm [resolvable:$true] %s2803
          %2809 = dma.vmem_to_hbm [thread:$0]  %s2802, 4096, %s2804, %s2787, 128, 128, 8
        $region56: #{tpu_custom_call.1} parent=31 // pred_fallthru
          _
      $region32: #{tpu_custom_call.1} parent=5 // pred_fallthru
        _
      %p2810 = scmp.le.s32.totalorder 2, %s18
      // Predicated region
      $region57: #{tpu_custom_call.1} parent=5 // pred_check
        %p2811 = pneg %p2810
      $region58: #{tpu_custom_call.1} parent=5 // pred_check_branch
        %2813 = sbr.rel (%p2811) target = $region60
      $region59: #{tpu_custom_call.1} parent=5 // pred_region
        %s2814 = ssub.s32 %s18, 2
        // Predicated region
        $region61: #{tpu_custom_call.1} parent=59 // pred_check
          %p2815 = pneg %p152
        $region62: #{tpu_custom_call.1} parent=59 // pred_check_branch
          %2817 = sbr.rel (%p2815) target = $region64
        $region63: #{tpu_custom_call.1} parent=59 // pred_region
          %s2818 = sand.u32 %s137, 1
          %s2819 = scalar_lea.sflag [#allocation8], %s2818
          %s2820 = sand.u32 %s137, 1
          %s2821 = smul.addr %s2820, 256
          %s2822 = scalar_lea.vmem [#allocation12], %s2821
          %2824 = dma.done %s2819, 4096
        $region64: #{tpu_custom_call.1} parent=59 // pred_fallthru
          _
      $region60: #{tpu_custom_call.1} parent=5 // pred_fallthru
        _
    $region6: #{tpu_custom_call.1} parent=1 // loop_footer
      %s22 = sadd.s32 1, %s18
    $region7: #{tpu_custom_call.1} parent=1 // loop_footer_branch
      %17 = sbr.rel target = $region3
    $region8: #{tpu_custom_call.1} parent=1 // loop_exit
      _
    %2825 = vsyncpa [#allocation7], 1
    %s2826 = scalar_lea.sflag [#allocation7], 1
    %2827 = vsyncpa %s2826, 1
    %2828 = vsyncpa [#allocation10], 1
    %s2829 = scalar_lea.sflag [#allocation10], 1
    %2830 = vsyncpa %s2829, 1
    %2831 = vsyncpa [#allocation8], 1
    %s2832 = scalar_lea.sflag [#allocation8], 1
    %2833 = vsyncpa %s2832, 1

</llo_original>
